<compile_context>
chip_gen: v6e
topology: v6e:2x2x1
jax: 0.10.0
libtpu: 0.0.40
codegen_flags: <defaults>
</compile_context>

<pallas_src>
import functools

import jax
import jax.numpy as jnp
from jax.experimental import pallas as pl
from jax.experimental.pallas import tpu as pltpu

LANE = 128               # TPU lane width; hidden/latent dims are zero-padded to this.
N_LAYERS = 6             # fc1, fc2, enc, fc3, fc4, dec
_LINEAR_LAYERS = (2, 5)  # enc / dec outputs have no ReLU


def _round_up(v, m):
    return ((v + m - 1) // m) * m


def actionae_kernel(x_ref, w_ref, b_ref, out_ref, *, action_dim, sub, sub_rows):
    """One batch tile through the whole 6-layer MLP.

    x_ref  : (tile_b, action_dim)   raw input activations (no lane padding)
    w_ref  : (6, 128, 128)          zero-padded weights, (in, out) layout per layer
    b_ref  : (6, 1, 128)            zero-padded biases
    out_ref: (tile_b, action_dim)   reconstruction
    """
    ad = action_dim
    # Narrow first/last layer params: sliced views of the VMEM-resident slabs.
    w_in = w_ref[0, :ad, :]        # (ad, 128)
    b_in = b_ref[0]                # (1, 128)
    w_out = w_ref[5, :, :ad]       # (128, ad)
    b_out = b_ref[5, :, :ad]       # (1, ad)

    # Split the tile into `sub` independent sub-tiles so successive layers'
    # matmuls interleave across sub-tiles (hides MXU result-FIFO latency).
    acts = []
    for s in range(sub):
        xs = x_ref[pl.ds(s * sub_rows, sub_rows), :]              # (sub_rows, ad)
        h = jnp.dot(xs, w_in, preferred_element_type=jnp.float32) + b_in
        acts.append(jnp.maximum(h, 0.0))                          # fc1 + ReLU

    # Middle layers fc2, enc, fc3, fc4 live entirely in the 128-padded space.
    for layer in range(1, N_LAYERS - 1):
        w = w_ref[layer]           # (128, 128)
        b = b_ref[layer]           # (1, 128)
        relu = layer not in _LINEAR_LAYERS
        nxt = []
        for s in range(sub):
            y = jnp.dot(acts[s], w, preferred_element_type=jnp.float32) + b
            if relu:
                y = jnp.maximum(y, 0.0)
            nxt.append(y)
        acts = nxt

    # dec: project back to action_dim lanes and store (narrow, contiguous in HBM).
    for s in range(sub):
        y = jnp.dot(acts[s], w_out, preferred_element_type=jnp.float32) + b_out
        out_ref[pl.ds(s * sub_rows, sub_rows), :] = y.astype(out_ref.dtype)


def prepare_params(params):
    """One-time prep: transpose, zero-pad to 128, pack into two slabs.

    params: dict name -> (W, b) with W: (out, in), b: (out,) like nn.Linear.
    Returns (w_slab (6,128,128) f32, b_slab (6,1,128) f32).  Call once; reuse.
    """
    names = ("fc1", "fc2", "enc", "fc3", "fc4", "dec")
    w_slab = jnp.zeros((N_LAYERS, LANE, LANE), jnp.float32)
    b_slab = jnp.zeros((N_LAYERS, 1, LANE), jnp.float32)
    for i, name in enumerate(names):
        W, b = params[name]
        out_d, in_d = W.shape
        assert in_d <= LANE and out_d <= LANE, "feature dims must be <= 128"
        w_slab = w_slab.at[i, :in_d, :out_d].set(W.T.astype(jnp.float32))
        b_slab = b_slab.at[i, 0, :out_d].set(b.astype(jnp.float32))
    return w_slab, b_slab


def action_ae_forward(x, prepared, *, max_tile_b=256, sub=2):
    """x: (B, action_dim) float32.  prepared = prepare_params(params)."""
    w_slab, b_slab = prepared
    B, action_dim = x.shape
    assert action_dim <= LANE

    # Batch tiling: tile_b rows per grid step, split into `sub` sub-tiles.
    tile_b = _round_up(min(max_tile_b, _round_up(B, 8 * sub)), 8 * sub)
    b_pad = _round_up(B, tile_b)
    sub_rows = tile_b // sub
    grid = (b_pad // tile_b,)

    # Only the batch dim is (cheaply) padded; lanes stay at action_dim so the
    # HBM<->VMEM DMAs move exactly B*action_dim elements (plus tiny tail pad).
    xp = x if b_pad == B else jnp.pad(x, ((0, b_pad - B), (0, 0)))

    kernel = functools.partial(actionae_kernel, action_dim=action_dim,
                               sub=sub, sub_rows=sub_rows)

    out = pl.pallas_call(
        kernel,
        out_shape=jax.ShapeDtypeStruct((b_pad, action_dim), x.dtype),
        grid=grid,
        in_specs=[
            pl.BlockSpec((tile_b, action_dim), lambda i: (i, 0)),
            # Constant index_maps -> weight/bias slabs stay VMEM-resident.
            pl.BlockSpec((N_LAYERS, LANE, LANE), lambda i: (0, 0, 0)),
            pl.BlockSpec((N_LAYERS, 1, LANE), lambda i: (0, 0, 0)),
        ],
        out_specs=pl.BlockSpec((tile_b, action_dim), lambda i: (i, 0)),
        compiler_params=pltpu.CompilerParams(
            dimension_semantics=("parallel",)),
    )(xp, w_slab, b_slab)

    return out if b_pad == B else out[:B]


def _init_linear(key, out_dim, in_dim):
    # Mimics PyTorch's default nn.Linear init: U(-1/sqrt(in), 1/sqrt(in)).
    kw, kb = jax.random.split(key)
    bound = 1.0 / jnp.sqrt(jnp.float32(in_dim))
    W = jax.random.uniform(kw, (out_dim, in_dim), jnp.float32, -bound, bound)
    b = jax.random.uniform(kb, (out_dim,), jnp.float32, -bound, bound)
    return W, b


def make_params(key, action_dim, act_rep_dim, hidden_dim):
    keys = jax.random.split(key, 6)
    return {
        "fc1": _init_linear(keys[0], hidden_dim, action_dim),
        "fc2": _init_linear(keys[1], hidden_dim, hidden_dim),
        "enc": _init_linear(keys[2], act_rep_dim, hidden_dim),
        "fc3": _init_linear(keys[3], hidden_dim, act_rep_dim),
        "fc4": _init_linear(keys[4], hidden_dim, hidden_dim),
        "dec": _init_linear(keys[5], action_dim, hidden_dim),
    }


def action_ae_reference(x, params):
    """Pure-JAX reference of ActionAE.forward for validation."""
    def lin(h, name):
        W, b = params[name]
        return h @ W.T + b
    h = jax.nn.relu(lin(x, "fc1"))
    h = jax.nn.relu(lin(h, "fc2"))
    z = lin(h, "enc")
    h = jax.nn.relu(lin(z, "fc3"))
    h = jax.nn.relu(lin(h, "fc4"))
    return lin(h, "dec")


if __name__ == "__main__":
    action_dim, act_rep_dim, hidden_dim = 8, 4, 32
    batch = 300   # not a tile multiple -> exercises batch padding + a 2-step grid

    key = jax.random.PRNGKey(0)
    k_params, k_x = jax.random.split(key)
    params = make_params(k_params, action_dim, act_rep_dim, hidden_dim)
    x = jax.random.normal(k_x, (batch, action_dim), jnp.float32)

    prepared = prepare_params(params)   # one-time prep, hoisted out of forward

    x_rec = action_ae_forward(x, prepared)
    x_rec = jax.block_until_ready(x_rec)

    ref = action_ae_reference(x, params)
    assert x_rec.shape == (batch, action_dim)
    assert jnp.allclose(x_rec, ref, atol=1e-4, rtol=1e-4), \
        float(jnp.max(jnp.abs(x_rec - ref)))

    print("KERNEL_OK")
</pallas_src>

<mosaic_0001>
module attributes {stable_mosaic.version = 11 : i64} {
  func.func @actionae_kernel(%arg0: i32, %arg1: memref<256x8xf32, #tpu.memory_space<vmem>>, %arg2: memref<6x128x128xf32, #tpu.memory_space<vmem>>, %arg3: memref<6x1x128xf32, #tpu.memory_space<vmem>>, %arg4: memref<256x8xf32, #tpu.memory_space<vmem>>) attributes {dimension_semantics = [#tpu.dimension_semantics<parallel>], iteration_bounds = array<i64: 2>, scalar_prefetch = 0 : i64, scratch_operands = 0 : i64, tpu.core_type = #tpu.core_type<tc>, window_params = [{transform_indices = @transform_0, window_bounds = array<i64: 256, 8>}, {pipeline_mode = #tpu.pipeline_mode<synchronous>, transform_indices = @transform_1, window_bounds = array<i64: 6, 128, 128>}, {pipeline_mode = #tpu.pipeline_mode<synchronous>, transform_indices = @transform_2, window_bounds = array<i64: 6, 1, 128>}, {transform_indices = @transform_3, window_bounds = array<i64: 256, 8>}]} {
    %c0 = arith.constant 0 : index
    %c0_0 = arith.constant 0 : index
    %c0_1 = arith.constant 0 : index
    %0 = vector.load %arg2[%c0, %c0_0, %c0_1] : memref<6x128x128xf32, #tpu.memory_space<vmem>>, vector<1x8x128xf32>
    %1 = vector.shape_cast %0 : vector<1x8x128xf32> to vector<8x128xf32>
    %c0_2 = arith.constant 0 : index
    %c0_3 = arith.constant 0 : index
    %c0_4 = arith.constant 0 : index
    %2 = vector.load %arg3[%c0_2, %c0_3, %c0_4] : memref<6x1x128xf32, #tpu.memory_space<vmem>>, vector<1x1x128xf32>
    %3 = vector.shape_cast %2 : vector<1x1x128xf32> to vector<1x128xf32>
    %c5 = arith.constant 5 : index
    %c0_5 = arith.constant 0 : index
    %c0_6 = arith.constant 0 : index
    %4 = vector.load %arg2[%c5, %c0_5, %c0_6] : memref<6x128x128xf32, #tpu.memory_space<vmem>>, vector<1x128x8xf32>
    %5 = vector.shape_cast %4 : vector<1x128x8xf32> to vector<128x8xf32>
    %c5_7 = arith.constant 5 : index
    %c0_8 = arith.constant 0 : index
    %c0_9 = arith.constant 0 : index
    %6 = vector.load %arg3[%c5_7, %c0_8, %c0_9] : memref<6x1x128xf32, #tpu.memory_space<vmem>>, vector<1x1x8xf32>
    %7 = vector.shape_cast %6 : vector<1x1x8xf32> to vector<1x8xf32>
    %c0_10 = arith.constant 0 : index
    %c0_11 = arith.constant 0 : index
    %8 = vector.load %arg1[%c0_10, %c0_11] : memref<256x8xf32, #tpu.memory_space<vmem>>, vector<128x8xf32>
    %cst = arith.constant dense<0.000000e+00> : vector<128x128xf32>
    %9 = tpu.matmul %8, %1, %cst {dimension_numbers = #tpu.dot_dimension_numbers<[1], [0], [0], [1], [0, 0, 1, 1], [], []>} : vector<128x8xf32>, vector<8x128xf32>, vector<128x128xf32> -> vector<128x128xf32>
    %10 = vector.broadcast %3 : vector<1x128xf32> to vector<128x128xf32>
    %11 = arith.addf %9, %10 : vector<128x128xf32>
    %cst_12 = arith.constant 0.000000e+00 : f32
    %12 = vector.broadcast %cst_12 : f32 to vector<128x128xf32>
    %13 = arith.maximumf %11, %12 : vector<128x128xf32>
    %c128 = arith.constant 128 : index
    %c0_13 = arith.constant 0 : index
    %14 = vector.load %arg1[%c128, %c0_13] : memref<256x8xf32, #tpu.memory_space<vmem>>, vector<128x8xf32>
    %cst_14 = arith.constant dense<0.000000e+00> : vector<128x128xf32>
    %15 = tpu.matmul %14, %1, %cst_14 {dimension_numbers = #tpu.dot_dimension_numbers<[1], [0], [0], [1], [0, 0, 1, 1], [], []>} : vector<128x8xf32>, vector<8x128xf32>, vector<128x128xf32> -> vector<128x128xf32>
    %16 = vector.broadcast %3 : vector<1x128xf32> to vector<128x128xf32>
    %17 = arith.addf %15, %16 : vector<128x128xf32>
    %cst_15 = arith.constant 0.000000e+00 : f32
    %18 = vector.broadcast %cst_15 : f32 to vector<128x128xf32>
    %19 = arith.maximumf %17, %18 : vector<128x128xf32>
    %c1 = arith.constant 1 : index
    %c0_16 = arith.constant 0 : index
    %c0_17 = arith.constant 0 : index
    %20 = vector.load %arg2[%c1, %c0_16, %c0_17] : memref<6x128x128xf32, #tpu.memory_space<vmem>>, vector<1x128x128xf32>
    %21 = vector.shape_cast %20 : vector<1x128x128xf32> to vector<128x128xf32>
    %c1_18 = arith.constant 1 : index
    %c0_19 = arith.constant 0 : index
    %c0_20 = arith.constant 0 : index
    %22 = vector.load %arg3[%c1_18, %c0_19, %c0_20] : memref<6x1x128xf32, #tpu.memory_space<vmem>>, vector<1x1x128xf32>
    %23 = vector.shape_cast %22 : vector<1x1x128xf32> to vector<1x128xf32>
    %cst_21 = arith.constant dense<0.000000e+00> : vector<128x128xf32>
    %24 = tpu.matmul %13, %21, %cst_21 {dimension_numbers = #tpu.dot_dimension_numbers<[1], [0], [0], [1], [0, 0, 1, 1], [], []>} : vector<128x128xf32>, vector<128x128xf32>, vector<128x128xf32> -> vector<128x128xf32>
    %25 = vector.broadcast %23 : vector<1x128xf32> to vector<128x128xf32>
    %26 = arith.addf %24, %25 : vector<128x128xf32>
    %cst_22 = arith.constant 0.000000e+00 : f32
    %27 = vector.broadcast %cst_22 : f32 to vector<128x128xf32>
    %28 = arith.maximumf %26, %27 : vector<128x128xf32>
    %cst_23 = arith.constant dense<0.000000e+00> : vector<128x128xf32>
    %29 = tpu.matmul %19, %21, %cst_23 {dimension_numbers = #tpu.dot_dimension_numbers<[1], [0], [0], [1], [0, 0, 1, 1], [], []>} : vector<128x128xf32>, vector<128x128xf32>, vector<128x128xf32> -> vector<128x128xf32>
    %30 = vector.broadcast %23 : vector<1x128xf32> to vector<128x128xf32>
    %31 = arith.addf %29, %30 : vector<128x128xf32>
    %cst_24 = arith.constant 0.000000e+00 : f32
    %32 = vector.broadcast %cst_24 : f32 to vector<128x128xf32>
    %33 = arith.maximumf %31, %32 : vector<128x128xf32>
    %c2 = arith.constant 2 : index
    %c0_25 = arith.constant 0 : index
    %c0_26 = arith.constant 0 : index
    %34 = vector.load %arg2[%c2, %c0_25, %c0_26] : memref<6x128x128xf32, #tpu.memory_space<vmem>>, vector<1x128x128xf32>
    %35 = vector.shape_cast %34 : vector<1x128x128xf32> to vector<128x128xf32>
    %c2_27 = arith.constant 2 : index
    %c0_28 = arith.constant 0 : index
    %c0_29 = arith.constant 0 : index
    %36 = vector.load %arg3[%c2_27, %c0_28, %c0_29] : memref<6x1x128xf32, #tpu.memory_space<vmem>>, vector<1x1x128xf32>
    %37 = vector.shape_cast %36 : vector<1x1x128xf32> to vector<1x128xf32>
    %cst_30 = arith.constant dense<0.000000e+00> : vector<128x128xf32>
    %38 = tpu.matmul %28, %35, %cst_30 {dimension_numbers = #tpu.dot_dimension_numbers<[1], [0], [0], [1], [0, 0, 1, 1], [], []>} : vector<128x128xf32>, vector<128x128xf32>, vector<128x128xf32> -> vector<128x128xf32>
    %39 = vector.broadcast %37 : vector<1x128xf32> to vector<128x128xf32>
    %40 = arith.addf %38, %39 : vector<128x128xf32>
    %cst_31 = arith.constant dense<0.000000e+00> : vector<128x128xf32>
    %41 = tpu.matmul %33, %35, %cst_31 {dimension_numbers = #tpu.dot_dimension_numbers<[1], [0], [0], [1], [0, 0, 1, 1], [], []>} : vector<128x128xf32>, vector<128x128xf32>, vector<128x128xf32> -> vector<128x128xf32>
    %42 = vector.broadcast %37 : vector<1x128xf32> to vector<128x128xf32>
    %43 = arith.addf %41, %42 : vector<128x128xf32>
    %c3 = arith.constant 3 : index
    %c0_32 = arith.constant 0 : index
    %c0_33 = arith.constant 0 : index
    %44 = vector.load %arg2[%c3, %c0_32, %c0_33] : memref<6x128x128xf32, #tpu.memory_space<vmem>>, vector<1x128x128xf32>
    %45 = vector.shape_cast %44 : vector<1x128x128xf32> to vector<128x128xf32>
    %c3_34 = arith.constant 3 : index
    %c0_35 = arith.constant 0 : index
    %c0_36 = arith.constant 0 : index
    %46 = vector.load %arg3[%c3_34, %c0_35, %c0_36] : memref<6x1x128xf32, #tpu.memory_space<vmem>>, vector<1x1x128xf32>
    %47 = vector.shape_cast %46 : vector<1x1x128xf32> to vector<1x128xf32>
    %cst_37 = arith.constant dense<0.000000e+00> : vector<128x128xf32>
    %48 = tpu.matmul %40, %45, %cst_37 {dimension_numbers = #tpu.dot_dimension_numbers<[1], [0], [0], [1], [0, 0, 1, 1], [], []>} : vector<128x128xf32>, vector<128x128xf32>, vector<128x128xf32> -> vector<128x128xf32>
    %49 = vector.broadcast %47 : vector<1x128xf32> to vector<128x128xf32>
    %50 = arith.addf %48, %49 : vector<128x128xf32>
    %cst_38 = arith.constant 0.000000e+00 : f32
    %51 = vector.broadcast %cst_38 : f32 to vector<128x128xf32>
    %52 = arith.maximumf %50, %51 : vector<128x128xf32>
    %cst_39 = arith.constant dense<0.000000e+00> : vector<128x128xf32>
    %53 = tpu.matmul %43, %45, %cst_39 {dimension_numbers = #tpu.dot_dimension_numbers<[1], [0], [0], [1], [0, 0, 1, 1], [], []>} : vector<128x128xf32>, vector<128x128xf32>, vector<128x128xf32> -> vector<128x128xf32>
    %54 = vector.broadcast %47 : vector<1x128xf32> to vector<128x128xf32>
    %55 = arith.addf %53, %54 : vector<128x128xf32>
    %cst_40 = arith.constant 0.000000e+00 : f32
    %56 = vector.broadcast %cst_40 : f32 to vector<128x128xf32>
    %57 = arith.maximumf %55, %56 : vector<128x128xf32>
    %c4 = arith.constant 4 : index
    %c0_41 = arith.constant 0 : index
    %c0_42 = arith.constant 0 : index
    %58 = vector.load %arg2[%c4, %c0_41, %c0_42] : memref<6x128x128xf32, #tpu.memory_space<vmem>>, vector<1x128x128xf32>
    %59 = vector.shape_cast %58 : vector<1x128x128xf32> to vector<128x128xf32>
    %c4_43 = arith.constant 4 : index
    %c0_44 = arith.constant 0 : index
    %c0_45 = arith.constant 0 : index
    %60 = vector.load %arg3[%c4_43, %c0_44, %c0_45] : memref<6x1x128xf32, #tpu.memory_space<vmem>>, vector<1x1x128xf32>
    %61 = vector.shape_cast %60 : vector<1x1x128xf32> to vector<1x128xf32>
    %cst_46 = arith.constant dense<0.000000e+00> : vector<128x128xf32>
    %62 = tpu.matmul %52, %59, %cst_46 {dimension_numbers = #tpu.dot_dimension_numbers<[1], [0], [0], [1], [0, 0, 1, 1], [], []>} : vector<128x128xf32>, vector<128x128xf32>, vector<128x128xf32> -> vector<128x128xf32>
    %63 = vector.broadcast %61 : vector<1x128xf32> to vector<128x128xf32>
    %64 = arith.addf %62, %63 : vector<128x128xf32>
    %cst_47 = arith.constant 0.000000e+00 : f32
    %65 = vector.broadcast %cst_47 : f32 to vector<128x128xf32>
    %66 = arith.maximumf %64, %65 : vector<128x128xf32>
    %cst_48 = arith.constant dense<0.000000e+00> : vector<128x128xf32>
    %67 = tpu.matmul %57, %59, %cst_48 {dimension_numbers = #tpu.dot_dimension_numbers<[1], [0], [0], [1], [0, 0, 1, 1], [], []>} : vector<128x128xf32>, vector<128x128xf32>, vector<128x128xf32> -> vector<128x128xf32>
    %68 = vector.broadcast %61 : vector<1x128xf32> to vector<128x128xf32>
    %69 = arith.addf %67, %68 : vector<128x128xf32>
    %cst_49 = arith.constant 0.000000e+00 : f32
    %70 = vector.broadcast %cst_49 : f32 to vector<128x128xf32>
    %71 = arith.maximumf %69, %70 : vector<128x128xf32>
    %cst_50 = arith.constant dense<0.000000e+00> : vector<128x8xf32>
    %72 = tpu.matmul %66, %5, %cst_50 {dimension_numbers = #tpu.dot_dimension_numbers<[1], [0], [0], [1], [0, 0, 1, 1], [], []>} : vector<128x128xf32>, vector<128x8xf32>, vector<128x8xf32> -> vector<128x8xf32>
    %73 = vector.broadcast %7 : vector<1x8xf32> to vector<128x8xf32>
    %74 = arith.addf %72, %73 : vector<128x8xf32>
    %c0_51 = arith.constant 0 : index
    %c0_52 = arith.constant 0 : index
    %75 = vector.load %arg4[%c0_51, %c0_52] : memref<256x8xf32, #tpu.memory_space<vmem>>, vector<128x8xf32>
    tpu.vector_store %arg4[%c0_51, %c0_52], %74 {strides = array<i32>} : memref<256x8xf32, #tpu.memory_space<vmem>>, vector<128x8xf32>,
    %cst_53 = arith.constant dense<0.000000e+00> : vector<128x8xf32>
    %76 = tpu.matmul %71, %5, %cst_53 {dimension_numbers = #tpu.dot_dimension_numbers<[1], [0], [0], [1], [0, 0, 1, 1], [], []>} : vector<128x128xf32>, vector<128x8xf32>, vector<128x8xf32> -> vector<128x8xf32>
    %77 = vector.broadcast %7 : vector<1x8xf32> to vector<128x8xf32>
    %78 = arith.addf %76, %77 : vector<128x8xf32>
    %c128_54 = arith.constant 128 : index
    %c0_55 = arith.constant 0 : index
    %79 = vector.load %arg4[%c128_54, %c0_55] : memref<256x8xf32, #tpu.memory_space<vmem>>, vector<128x8xf32>
    tpu.vector_store %arg4[%c128_54, %c0_55], %78 {strides = array<i32>} : memref<256x8xf32, #tpu.memory_space<vmem>>, vector<128x8xf32>,
    return
  }
  func.func @transform_0(%arg0: i32) -> (i32, i32) {
    %c0_i32 = arith.constant 0 : i32
    %c0_i32_0 = arith.constant 0 : i32
    return %arg0, %c0_i32 : i32, i32
  }
  func.func @transform_1(%arg0: i32) -> (i32, i32, i32) {
    %c0_i32 = arith.constant 0 : i32
    %c0_i32_0 = arith.constant 0 : i32
    %c0_i32_1 = arith.constant 0 : i32
    %c0_i32_2 = arith.constant 0 : i32
    return %c0_i32, %c0_i32_0, %c0_i32_1 : i32, i32, i32
  }
  func.func @transform_2(%arg0: i32) -> (i32, i32, i32) {
    %c0_i32 = arith.constant 0 : i32
    %c0_i32_0 = arith.constant 0 : i32
    %c0_i32_1 = arith.constant 0 : i32
    %c0_i32_2 = arith.constant 0 : i32
    return %c0_i32, %c0_i32_0, %c0_i32_1 : i32, i32, i32
  }
  func.func @transform_3(%arg0: i32) -> (i32, i32) {
    %c0_i32 = arith.constant 0 : i32
    %c0_i32_0 = arith.constant 0 : i32
    return %arg0, %c0_i32 : i32, i32
  }
}

</mosaic_0001>

<llo_original>
// kernel: tpu_custom_call.1
$region0: #{tpu_custom_call.1}
  #allocation0 [shape = 'u32[]', space=smem, size = 0x4, offset = 0x4, fixed_abs, tag = 'smem constant byte address 0x4 - core index']
  #allocation1 [shape = 'u32[144,128]{1,0:T(1,128)}', space=vmem, size = 0x12000, scoped, tag = 'internal scratch']
  %s0 = inlined_call_operand.vmem [shape: f32[512,8], index: 0, kind: input, shape index: {}]
  %s1 = inlined_call_operand.hbm [shape: f32[6,128,128], index: 1, kind: input, shape index: {}]
  %s2 = inlined_call_operand.vmem [shape: f32[6,1,128], index: 2, kind: input, shape index: {}]
  %s3 = inlined_call_operand.vmem [shape: f32[512,8], index: 3, kind: output, shape index: {}]
  %s4 = sld [smem:[#allocation0]]
  $region49: #{tpu_custom_call.1} parent=0
    _
  %s6 = ssub.s32 1, %s4
  %s7 = scalar_select 0, %s6, %s4
  $region1: #{tpu_custom_call.1} parent=0
    #allocation2 [shape = 'u8[393216]{0}', space=vmem, size = 0x60000, scoped, tag = 'input window, operand 1, single buffered']
    #allocation3 [shape = 's32[2]{0}', space=sflag, size = 0x8, scoped, tag = 'scoped memory for tpu_custom_call.1']
    %8 = vsyncpa [#allocation3], 0
    loop: start=0, step=1, limit=4
    $region2: #{tpu_custom_call.1} parent=1 // loop_pre_header
      _
    $region3: #{tpu_custom_call.1} parent=1 // loop_header
      %s10 = sphi 0, %s14
      %p11 = scmp.ge.s32.totalorder %s10, 4
      %s20 = sphi 0, %s22
      %s23 = sphi 0, %s20
      %s24 = sphi 0, %s23
      %s40 = sphi 0, %s24
      %s44 = sphi 0, %s44
      %s46 = sphi 0, %s44
      %s47 = sphi 0, %s46
      %s61 = sphi 0, %s47
      %s65 = sphi 0, %s65
      %s67 = sphi 0, %s65
      %s68 = sphi 0, %s67
      %s82 = sphi 0, %s68
      %s88 = sphi 0, %s90
      %s91 = sphi 0, %s88
      %s92 = sphi 0, %s91
      %s108 = sphi 0, %s92
    $region4: #{tpu_custom_call.1} parent=1 // loop_header_branch
      %13 = sbr.rel (%p11) target = $region8
    $region5: #{tpu_custom_call.1} parent=1 // loop_body
      %s15 = ssub.s32 %s10, 1
      %s16 = ssub.s32 %s10, 2
      %s17 = sadd.s32 %s10, 1
      %s18 = ssub.s32 %s10, %s17
      %p19 = scmp.eq.s32.totalorder %s18, 0
      %s21 = sadd.s32 %s20, 1
      %s22 = scalar_select %p19, %s20, %s21
      %p25 = pneg %p19
      %p26 = scmp.eq.s32.totalorder %s10, 1
      %p27 = por %p25, %p26
      %p28 = scmp.ne.s32.totalorder %s20, %s23
      %p29 = scmp.eq.s32.totalorder %s10, 0
      %p30 = por %p28, %p29
      %p31 = scmp.ne.s32.totalorder %s20, %s23
      %p32 = scmp.eq.s32.totalorder %s15, 1
      %p33 = por %p31, %p32
      %p34 = scmp.ne.s32.totalorder %s23, %s24
      %p35 = scmp.eq.s32.totalorder %s15, 0
      %p36 = por %p34, %p35
      %p37 = scmp.ne.s32.totalorder %s23, %s24
      %p38 = scmp.eq.s32.totalorder %s16, 1
      %p39 = por %p37, %p38
      %p41 = scmp.ne.s32.totalorder %s24, %s40
      %p42 = scmp.eq.s32.totalorder %s16, 0
      %p43 = por %p41, %p42
      %s45 = sadd.s32 %s44, 1
      %p48 = scmp.eq.s32.totalorder %s10, 1
      %p49 = scmp.ne.s32.totalorder %s44, %s46
      %p50 = scmp.eq.s32.totalorder %s10, 0
      %p51 = por %p49, %p50
      %p52 = scmp.ne.s32.totalorder %s44, %s46
      %p53 = scmp.eq.s32.totalorder %s15, 1
      %p54 = por %p52, %p53
      %p55 = scmp.ne.s32.totalorder %s46, %s47
      %p56 = scmp.eq.s32.totalorder %s15, 0
      %p57 = por %p55, %p56
      %p58 = scmp.ne.s32.totalorder %s46, %s47
      %p59 = scmp.eq.s32.totalorder %s16, 1
      %p60 = por %p58, %p59
      %p62 = scmp.ne.s32.totalorder %s47, %s61
      %p63 = scmp.eq.s32.totalorder %s16, 0
      %p64 = por %p62, %p63
      %s66 = sadd.s32 %s65, 1
      %p69 = scmp.eq.s32.totalorder %s10, 1
      %p70 = scmp.ne.s32.totalorder %s65, %s67
      %p71 = scmp.eq.s32.totalorder %s10, 0
      %p72 = por %p70, %p71
      %p73 = scmp.ne.s32.totalorder %s65, %s67
      %p74 = scmp.eq.s32.totalorder %s15, 1
      %p75 = por %p73, %p74
      %p76 = scmp.ne.s32.totalorder %s67, %s68
      %p77 = scmp.eq.s32.totalorder %s15, 0
      %p78 = por %p76, %p77
      %p79 = scmp.ne.s32.totalorder %s67, %s68
      %p80 = scmp.eq.s32.totalorder %s16, 1
      %p81 = por %p79, %p80
      %p83 = scmp.ne.s32.totalorder %s68, %s82
      %p84 = scmp.eq.s32.totalorder %s16, 0
      %p85 = por %p83, %p84
      %s86 = ssub.s32 %s10, %s17
      %p87 = scmp.eq.s32.totalorder %s86, 0
      %s89 = sadd.s32 %s88, 1
      %s90 = scalar_select %p87, %s88, %s89
      %p93 = pneg %p87
      %p94 = scmp.eq.s32.totalorder %s10, 1
      %p95 = por %p93, %p94
      %p96 = scmp.ne.s32.totalorder %s88, %s91
      %p97 = scmp.eq.s32.totalorder %s10, 0
      %p98 = por %p96, %p97
      %p99 = scmp.ne.s32.totalorder %s88, %s91
      %p100 = scmp.eq.s32.totalorder %s15, 1
      %p101 = por %p99, %p100
      %p102 = scmp.ne.s32.totalorder %s91, %s92
      %p103 = scmp.eq.s32.totalorder %s15, 0
      %p104 = por %p102, %p103
      %p105 = scmp.ne.s32.totalorder %s91, %s92
      %p106 = scmp.eq.s32.totalorder %s16, 1
      %p107 = por %p105, %p106
      %p109 = scmp.ne.s32.totalorder %s92, %s108
      %p110 = scmp.eq.s32.totalorder %s16, 0
      %p111 = por %p109, %p110
      %p112 = scmp.le.s32.totalorder 1, %s10
      %p113 = scmp.lt.s32.totalorder %s10, 3
      %p114 = pnand %p112, %p113
      %p115 = pneg %p114
      // Predicated region
      $region9: #{tpu_custom_call.1} parent=5 // pred_check
        _
      $region10: #{tpu_custom_call.1} parent=5 // pred_check_branch
        %117 = sbr.rel (%p114) target = $region12
      $region11: #{tpu_custom_call.1} parent=5 // pred_region
        %s118 = ssub.s32 %s10, 1
        // Predicated region
        $region13: #{tpu_custom_call.1} parent=11 // pred_check
          %p119 = pneg %p57
        $region14: #{tpu_custom_call.1} parent=11 // pred_check_branch
          %121 = sbr.rel (%p119) target = $region16
        $region15: #{tpu_custom_call.1} parent=11 // pred_region
          %s123 = ssub.s32 12288, 12288
          %124 = vsyncadd [#allocation3], %s123
          %s125 = sshll.u32 [#allocation2], 4
          %s126 = int_to_ptr.vmem [resolvable:$true] %s125
          %131 = dma.hbm_to_vmem [thread:$0]  %s1, 12288, %s126, [#allocation3], 128, 128, 8
        $region16: #{tpu_custom_call.1} parent=11 // pred_fallthru
          _
        // Predicated region
        $region17: #{tpu_custom_call.1} parent=11 // pred_check
          %p132 = pneg %p78
        $region18: #{tpu_custom_call.1} parent=11 // pred_check_branch
          %134 = sbr.rel (%p132) target = $region20
        $region19: #{tpu_custom_call.1} parent=11 // pred_region
          _
        $region20: #{tpu_custom_call.1} parent=11 // pred_fallthru
          _
      $region12: #{tpu_custom_call.1} parent=5 // pred_fallthru
        _
      %p135 = scmp.lt.s32.totalorder %s10, 2
      // Predicated region
      $region21: #{tpu_custom_call.1} parent=5 // pred_check
        %p136 = pneg %p135
      $region22: #{tpu_custom_call.1} parent=5 // pred_check_branch
        %138 = sbr.rel (%p136) target = $region24
      $region23: #{tpu_custom_call.1} parent=5 // pred_region
        // Predicated region
        $region25: #{tpu_custom_call.1} parent=23 // pred_check
          %p139 = pneg %p30
        $region26: #{tpu_custom_call.1} parent=23 // pred_check_branch
          %141 = sbr.rel (%p139) target = $region28
        $region27: #{tpu_custom_call.1} parent=23 // pred_region
          %s142 = smul.u32 32, %s10
          %p143 = scmp.lt.s32.totalorder %s142, 63
          %s144 = scalar_select %p143, %s142, 63
          %s145 = smul.addr %s144, 8
          %s146 = scalar_lea.vmem %s0, %s145
          %s147 = smul.u32 32, %s10
        $region28: #{tpu_custom_call.1} parent=23 // pred_fallthru
          _
      $region24: #{tpu_custom_call.1} parent=5 // pred_fallthru
        _
      %p148 = scmp.le.s32.totalorder 1, %s10
      %p149 = scmp.lt.s32.totalorder %s10, 3
      %p150 = pnand %p148, %p149
      %p151 = pneg %p150
      // Predicated region
      $region29: #{tpu_custom_call.1} parent=5 // pred_check
        _
      $region30: #{tpu_custom_call.1} parent=5 // pred_check_branch
        %153 = sbr.rel (%p150) target = $region32
      $region31: #{tpu_custom_call.1} parent=5 // pred_region
        %s154 = ssub.s32 %s10, 1
        // Predicated region
        $region33: #{tpu_custom_call.1} parent=31 // pred_check
          %p155 = pneg %p57
        $region34: #{tpu_custom_call.1} parent=31 // pred_check_branch
          %157 = sbr.rel (%p155) target = $region36
        $region35: #{tpu_custom_call.1} parent=31 // pred_region
          %158 = dma.done [#allocation3], 12288
        $region36: #{tpu_custom_call.1} parent=31 // pred_fallthru
          _
        %s159 = smul.u32 32, %s15
        %p160 = scmp.lt.s32.totalorder %s159, 63
        %s161 = scalar_select %p160, %s159, 63
        %s162 = smul.addr %s161, 8
        %s163 = scalar_lea.vmem %s0, %s162
        %p164 = pneg %p36
        %p165 = pneg %p33
        %p166 = pneg %p57
        %p167 = pneg %p54
        %p168 = pneg %p78
        %p169 = pneg %p75
        %p170 = pneg %p104
        %p171 = pneg %p101
        %s172 = smul.u32 32, %s15
        %p173 = scmp.lt.s32.totalorder %s172, 63
        %s174 = scalar_select %p173, %s172, 63
        %s175 = smul.addr %s174, 8
        %s176 = scalar_lea.vmem %s3, %s175
        %s177 = smul.u32 32, %s15
        %p178 = scmp.lt.s32.totalorder %s177, 63
        %s179 = scalar_select %p178, %s177, 63
        %s180 = smul.addr %s179, 8
        %s181 = scalar_lea.vmem %s0, %s180
        %s182 = smul.u32 32, %s15
        %s183 = smul.u32 32, %s15
        %p184 = scmp.lt.s32.totalorder %s183, 63
        %s185 = scalar_select %p184, %s183, 63
        %s186 = smul.addr %s185, 8
        %s187 = scalar_lea.vmem %s3, %s186
        %s188 = smul.u32 32, %s15
        %v189 = vld [vmem:[#allocation2] sm:$0xff]
        %v190 = vld [vmem:[%s2] sm:$0x1]
        %s191 = scalar_lea.vmem [#allocation2], 640
        %v192 = vld [vmem:[%s191] sm:$0xff]
        %v193 = vld [vmem:[%s191 + $0x8] sm:$0xff]
        %v194 = vld [vmem:[%s191 + $0x10] sm:$0xff]
        %v195 = vld [vmem:[%s191 + $0x18] sm:$0xff]
        %v196 = vld [vmem:[%s191 + $0x20] sm:$0xff]
        %v197 = vld [vmem:[%s191 + $0x28] sm:$0xff]
        %v198 = vld [vmem:[%s191 + $0x30] sm:$0xff]
        %v199 = vld [vmem:[%s191 + $0x38] sm:$0xff]
        %v200 = vld [vmem:[%s191 + $0x40] sm:$0xff]
        %v201 = vld [vmem:[%s191 + $0x48] sm:$0xff]
        %v202 = vld [vmem:[%s191 + $0x50] sm:$0xff]
        %v203 = vld [vmem:[%s191 + $0x58] sm:$0xff]
        %v204 = vld [vmem:[%s191 + $0x60] sm:$0xff]
        %v205 = vld [vmem:[%s191 + $0x68] sm:$0xff]
        %v206 = vld [vmem:[%s191 + $0x70] sm:$0xff]
        %v207 = vld [vmem:[%s191 + $0x78] sm:$0xff]
        %s208 = scalar_lea.vmem %s2, 5
        %v209 = vld [vmem:[%s208] sm:$0x1]
        %v210 = vld [vmem:[%s181] sm:$0xff]
        %v211 = vld [vmem:[%s181 + $0x8] sm:$0xff]
        %v212 = vld [vmem:[%s181 + $0x10] sm:$0xff]
        %v213 = vld [vmem:[%s181 + $0x18] sm:$0xff]
        %v214 = vld [vmem:[%s181 + $0x20] sm:$0xff]
        %v215 = vld [vmem:[%s181 + $0x28] sm:$0xff]
        %v216 = vld [vmem:[%s181 + $0x30] sm:$0xff]
        %v217 = vld [vmem:[%s181 + $0x38] sm:$0xff]
        %v218 = vld [vmem:[%s181 + $0x40] sm:$0xff]
        %v219 = vld [vmem:[%s181 + $0x48] sm:$0xff]
        %v220 = vld [vmem:[%s181 + $0x50] sm:$0xff]
        %v221 = vld [vmem:[%s181 + $0x58] sm:$0xff]
        %v222 = vld [vmem:[%s181 + $0x60] sm:$0xff]
        %v223 = vld [vmem:[%s181 + $0x68] sm:$0xff]
        %v224 = vld [vmem:[%s181 + $0x70] sm:$0xff]
        %v225 = vld [vmem:[%s181 + $0x78] sm:$0xff]
        %v227 = vlaneseq
        %v228 = vshrl.u32 %v227, 7
        %v229 = vsub.s32 0, %v228
        %v230 = vrot.slane %v190, %v229
        %vm232 = vcmask 64512
        %v234 = vsel %vm232, %v210, 0
        %v237 = vsel %vm232, %v211, 0
        %v240 = vsel %vm232, %v212, 0
        %v243 = vsel %vm232, %v213, 0
        %v246 = vsel %vm232, %v214, 0
        %v249 = vsel %vm232, %v215, 0
        %v252 = vsel %vm232, %v216, 0
        %v255 = vsel %vm232, %v217, 0
        %v258 = vsel %vm232, %v218, 0
        %v261 = vsel %vm232, %v219, 0
        %v264 = vsel %vm232, %v220, 0
        %v267 = vsel %vm232, %v221, 0
        %v270 = vsel %vm232, %v222, 0
        %v273 = vsel %vm232, %v223, 0
        %v276 = vsel %vm232, %v224, 0
        %v279 = vsel %vm232, %v225, 0
        %281 = vmatprep.subr.mxu0 0.0
        %282 = vmatpush1.msra.mxu0 0.0
        %283 = vmatprep.subr.mxu0 0.0
        %284 = vmatpush1.msra.mxu0 0.0
        %285 = vmatprep.subr.mxu0 0.0
        %286 = vmatpush1.msra.mxu0 0.0
        %287 = vmatprep.subr.mxu0 0.0
        %288 = vmatpush1.msra.mxu0 0.0
        %289 = vmatprep.subr.mxu0 0.0
        %290 = vmatpush1.msra.mxu0 0.0
        %291 = vmatprep.subr.mxu0 0.0
        %292 = vmatpush1.msra.mxu0 0.0
        %293 = vmatprep.subr.mxu0 0.0
        %294 = vmatpush1.msra.mxu0 0.0
        %295 = vmatprep.subr.mxu0 0.0
        %296 = vmatpush1.msra.mxu0 0.0
        %297 = vmatprep.subr.mxu0 0.0
        %298 = vmatpush1.msra.mxu0 0.0
        %299 = vmatprep.subr.mxu0 0.0
        %300 = vmatpush1.msra.mxu0 0.0
        %301 = vmatprep.subr.mxu0 0.0
        %302 = vmatpush1.msra.mxu0 0.0
        %303 = vmatprep.subr.mxu0 0.0
        %304 = vmatpush1.msra.mxu0 0.0
        %305 = vmatprep.subr.mxu0 0.0
        %306 = vmatpush1.msra.mxu0 0.0
        %307 = vmatprep.subr.mxu0 0.0
        %308 = vmatpush1.msra.mxu0 0.0
        %309 = vmatprep.subr.mxu0 0.0
        %310 = vmatpush1.msra.mxu0 0.0
        %311 = vmatprep.subr.mxu0 0.0
        %312 = vmatpush1.msra.mxu0 %v189
        %313 = vmatprep.subr.mxu0 0.0
        %314 = vmatpush2.msra.mxu0 0.0
        %315 = vmatprep.subr.mxu0 0.0
        %316 = vmatpush2.msra.mxu0 0.0
        %317 = vmatprep.subr.mxu0 0.0
        %318 = vmatpush2.msra.mxu0 0.0
        %319 = vmatprep.subr.mxu0 0.0
        %320 = vmatpush2.msra.mxu0 0.0
        %321 = vmatprep.subr.mxu0 0.0
        %322 = vmatpush2.msra.mxu0 0.0
        %323 = vmatprep.subr.mxu0 0.0
        %324 = vmatpush2.msra.mxu0 0.0
        %325 = vmatprep.subr.mxu0 0.0
        %326 = vmatpush2.msra.mxu0 0.0
        %327 = vmatprep.subr.mxu0 0.0
        %328 = vmatpush2.msra.mxu0 0.0
        %329 = vmatprep.subr.mxu0 0.0
        %330 = vmatpush2.msra.mxu0 0.0
        %331 = vmatprep.subr.mxu0 0.0
        %332 = vmatpush2.msra.mxu0 0.0
        %333 = vmatprep.subr.mxu0 0.0
        %334 = vmatpush2.msra.mxu0 0.0
        %335 = vmatprep.subr.mxu0 0.0
        %336 = vmatpush2.msra.mxu0 0.0
        %337 = vmatprep.subr.mxu0 0.0
        %338 = vmatpush2.msra.mxu0 0.0
        %339 = vmatprep.subr.mxu0 0.0
        %340 = vmatpush2.msra.mxu0 0.0
        %341 = vmatprep.subr.mxu0 0.0
        %342 = vmatpush2.msra.mxu0 0.0
        %343 = vmatprep.subr.mxu0 0.0
        %344 = vmatpush2.msra.mxu0 0.0
        %345 = vmatprep.mubr.f32.mxu0 0.0
        %346 = vmatmul.mubr.f32.gmra.mxu0 %v234
        %v347 = vpop.f32.mrf.mxu0
        %v348 = vadd.f32 %v230, %v347
        %v349 = vpop.f32.mrf.mxu0
        %350 = vmatprep.mubr.f32.mxu0 0.0
        %351 = vmatmul.mubr.f32.gmra.mxu0 %v237
        %v352 = vpop.f32.mrf.mxu0
        %v353 = vadd.f32 %v230, %v352
        %v354 = vpop.f32.mrf.mxu0
        %355 = vmatprep.mubr.f32.mxu0 0.0
        %356 = vmatmul.mubr.f32.gmra.mxu0 %v240
        %v357 = vpop.f32.mrf.mxu0
        %v358 = vadd.f32 %v230, %v357
        %v359 = vpop.f32.mrf.mxu0
        %360 = vmatprep.mubr.f32.mxu0 0.0
        %361 = vmatmul.mubr.f32.gmra.mxu0 %v243
        %v362 = vpop.f32.mrf.mxu0
        %v363 = vadd.f32 %v230, %v362
        %v364 = vpop.f32.mrf.mxu0
        %365 = vmatprep.mubr.f32.mxu0 0.0
        %366 = vmatmul.mubr.f32.gmra.mxu0 %v246
        %v367 = vpop.f32.mrf.mxu0
        %v368 = vadd.f32 %v230, %v367
        %v369 = vpop.f32.mrf.mxu0
        %370 = vmatprep.mubr.f32.mxu0 0.0
        %371 = vmatmul.mubr.f32.gmra.mxu0 %v249
        %v372 = vpop.f32.mrf.mxu0
        %v373 = vadd.f32 %v230, %v372
        %v374 = vpop.f32.mrf.mxu0
        %375 = vmatprep.mubr.f32.mxu0 0.0
        %376 = vmatmul.mubr.f32.gmra.mxu0 %v252
        %v377 = vpop.f32.mrf.mxu0
        %v378 = vadd.f32 %v230, %v377
        %v379 = vpop.f32.mrf.mxu0
        %380 = vmatprep.mubr.f32.mxu0 0.0
        %381 = vmatmul.mubr.f32.gmra.mxu0 %v255
        %v382 = vpop.f32.mrf.mxu0
        %v383 = vadd.f32 %v230, %v382
        %v384 = vpop.f32.mrf.mxu0
        %385 = vmatprep.mubr.f32.mxu0 0.0
        %386 = vmatmul.mubr.f32.gmra.mxu0 %v258
        %v387 = vpop.f32.mrf.mxu0
        %v388 = vadd.f32 %v230, %v387
        %v389 = vpop.f32.mrf.mxu0
        %390 = vmatprep.mubr.f32.mxu0 0.0
        %391 = vmatmul.mubr.f32.gmra.mxu0 %v261
        %v392 = vpop.f32.mrf.mxu0
        %v393 = vadd.f32 %v230, %v392
        %v394 = vpop.f32.mrf.mxu0
        %395 = vmatprep.mubr.f32.mxu0 0.0
        %396 = vmatmul.mubr.f32.gmra.mxu0 %v264
        %v397 = vpop.f32.mrf.mxu0
        %v398 = vadd.f32 %v230, %v397
        %v399 = vpop.f32.mrf.mxu0
        %400 = vmatprep.mubr.f32.mxu0 0.0
        %401 = vmatmul.mubr.f32.gmra.mxu0 %v267
        %v402 = vpop.f32.mrf.mxu0
        %v403 = vadd.f32 %v230, %v402
        %v404 = vpop.f32.mrf.mxu0
        %405 = vmatprep.mubr.f32.mxu0 0.0
        %406 = vmatmul.mubr.f32.gmra.mxu0 %v270
        %v407 = vpop.f32.mrf.mxu0
        %v408 = vadd.f32 %v230, %v407
        %v409 = vpop.f32.mrf.mxu0
        %410 = vmatprep.mubr.f32.mxu0 0.0
        %411 = vmatmul.mubr.f32.gmra.mxu0 %v273
        %v412 = vpop.f32.mrf.mxu0
        %v413 = vadd.f32 %v230, %v412
        %v414 = vpop.f32.mrf.mxu0
        %415 = vmatprep.mubr.f32.mxu0 0.0
        %416 = vmatmul.mubr.f32.gmra.mxu0 %v276
        %v417 = vpop.f32.mrf.mxu0
        %v418 = vadd.f32 %v230, %v417
        %v419 = vpop.f32.mrf.mxu0
        %420 = vmatprep.mubr.f32.mxu0 0.0
        %421 = vmatmul.mubr.f32.gmra.mxu0 %v279
        %v422 = vpop.f32.mrf.mxu0
        %v423 = vadd.f32 %v230, %v422
        %v424 = vpop.f32.mrf.mxu0
        %425 = vdwg.mxu0
        %v426 = vmax.f32 %v348, 0.0
        %v427 = vmax.f32 %v353, 0.0
        %v428 = vmax.f32 %v358, 0.0
        %v429 = vmax.f32 %v363, 0.0
        %v430 = vmax.f32 %v368, 0.0
        %v431 = vmax.f32 %v373, 0.0
        %v432 = vmax.f32 %v378, 0.0
        %v433 = vmax.f32 %v383, 0.0
        %v434 = vmax.f32 %v388, 0.0
        %v435 = vmax.f32 %v393, 0.0
        %v436 = vmax.f32 %v398, 0.0
        %v437 = vmax.f32 %v403, 0.0
        %v438 = vmax.f32 %v408, 0.0
        %v439 = vmax.f32 %v413, 0.0
        %v440 = vmax.f32 %v418, 0.0
        %v441 = vmax.f32 %v423, 0.0
        %v442 = vld [vmem:[%s181 + $0x80] sm:$0xff]
        %v443 = vld [vmem:[%s181 + $0x88] sm:$0xff]
        %v444 = vld [vmem:[%s181 + $0x90] sm:$0xff]
        %v445 = vld [vmem:[%s181 + $0x98] sm:$0xff]
        %v446 = vld [vmem:[%s181 + $0xa0] sm:$0xff]
        %v447 = vld [vmem:[%s181 + $0xa8] sm:$0xff]
        %v448 = vld [vmem:[%s181 + $0xb0] sm:$0xff]
        %v449 = vld [vmem:[%s181 + $0xb8] sm:$0xff]
        %v450 = vld [vmem:[%s181 + $0xc0] sm:$0xff]
        %v451 = vld [vmem:[%s181 + $0xc8] sm:$0xff]
        %v452 = vld [vmem:[%s181 + $0xd0] sm:$0xff]
        %v453 = vld [vmem:[%s181 + $0xd8] sm:$0xff]
        %v454 = vld [vmem:[%s181 + $0xe0] sm:$0xff]
        %v455 = vld [vmem:[%s181 + $0xe8] sm:$0xff]
        %v456 = vld [vmem:[%s181 + $0xf0] sm:$0xff]
        %v457 = vld [vmem:[%s181 + $0xf8] sm:$0xff]
        %v459 = vsel %vm232, %v442, 0
        %v462 = vsel %vm232, %v443, 0
        %v465 = vsel %vm232, %v444, 0
        %v468 = vsel %vm232, %v445, 0
        %v471 = vsel %vm232, %v446, 0
        %v474 = vsel %vm232, %v447, 0
        %v477 = vsel %vm232, %v448, 0
        %v480 = vsel %vm232, %v449, 0
        %v483 = vsel %vm232, %v450, 0
        %v486 = vsel %vm232, %v451, 0
        %v489 = vsel %vm232, %v452, 0
        %v492 = vsel %vm232, %v453, 0
        %v495 = vsel %vm232, %v454, 0
        %v498 = vsel %vm232, %v455, 0
        %v501 = vsel %vm232, %v456, 0
        %v504 = vsel %vm232, %v457, 0
        %506 = vmatprep.subr.mxu0 0.0
        %507 = vmatpush1.msra.mxu0 0.0
        %508 = vmatprep.subr.mxu0 0.0
        %509 = vmatpush1.msra.mxu0 0.0
        %510 = vmatprep.subr.mxu0 0.0
        %511 = vmatpush1.msra.mxu0 0.0
        %512 = vmatprep.subr.mxu0 0.0
        %513 = vmatpush1.msra.mxu0 0.0
        %514 = vmatprep.subr.mxu0 0.0
        %515 = vmatpush1.msra.mxu0 0.0
        %516 = vmatprep.subr.mxu0 0.0
        %517 = vmatpush1.msra.mxu0 0.0
        %518 = vmatprep.subr.mxu0 0.0
        %519 = vmatpush1.msra.mxu0 0.0
        %520 = vmatprep.subr.mxu0 0.0
        %521 = vmatpush1.msra.mxu0 0.0
        %522 = vmatprep.subr.mxu0 0.0
        %523 = vmatpush1.msra.mxu0 0.0
        %524 = vmatprep.subr.mxu0 0.0
        %525 = vmatpush1.msra.mxu0 0.0
        %526 = vmatprep.subr.mxu0 0.0
        %527 = vmatpush1.msra.mxu0 0.0
        %528 = vmatprep.subr.mxu0 0.0
        %529 = vmatpush1.msra.mxu0 0.0
        %530 = vmatprep.subr.mxu0 0.0
        %531 = vmatpush1.msra.mxu0 0.0
        %532 = vmatprep.subr.mxu0 0.0
        %533 = vmatpush1.msra.mxu0 0.0
        %534 = vmatprep.subr.mxu0 0.0
        %535 = vmatpush1.msra.mxu0 0.0
        %536 = vmatprep.subr.mxu0 0.0
        %537 = vmatpush1.msra.mxu0 %v189
        %538 = vmatprep.subr.mxu0 0.0
        %539 = vmatpush2.msra.mxu0 0.0
        %540 = vmatprep.subr.mxu0 0.0
        %541 = vmatpush2.msra.mxu0 0.0
        %542 = vmatprep.subr.mxu0 0.0
        %543 = vmatpush2.msra.mxu0 0.0
        %544 = vmatprep.subr.mxu0 0.0
        %545 = vmatpush2.msra.mxu0 0.0
        %546 = vmatprep.subr.mxu0 0.0
        %547 = vmatpush2.msra.mxu0 0.0
        %548 = vmatprep.subr.mxu0 0.0
        %549 = vmatpush2.msra.mxu0 0.0
        %550 = vmatprep.subr.mxu0 0.0
        %551 = vmatpush2.msra.mxu0 0.0
        %552 = vmatprep.subr.mxu0 0.0
        %553 = vmatpush2.msra.mxu0 0.0
        %554 = vmatprep.subr.mxu0 0.0
        %555 = vmatpush2.msra.mxu0 0.0
        %556 = vmatprep.subr.mxu0 0.0
        %557 = vmatpush2.msra.mxu0 0.0
        %558 = vmatprep.subr.mxu0 0.0
        %559 = vmatpush2.msra.mxu0 0.0
        %560 = vmatprep.subr.mxu0 0.0
        %561 = vmatpush2.msra.mxu0 0.0
        %562 = vmatprep.subr.mxu0 0.0
        %563 = vmatpush2.msra.mxu0 0.0
        %564 = vmatprep.subr.mxu0 0.0
        %565 = vmatpush2.msra.mxu0 0.0
        %566 = vmatprep.subr.mxu0 0.0
        %567 = vmatpush2.msra.mxu0 0.0
        %568 = vmatprep.subr.mxu0 0.0
        %569 = vmatpush2.msra.mxu0 0.0
        %570 = vmatprep.mubr.f32.mxu0 0.0
        %571 = vmatmul.mubr.f32.gmra.mxu0 %v459
        %v572 = vpop.f32.mrf.mxu0
        %v573 = vadd.f32 %v230, %v572
        %v574 = vpop.f32.mrf.mxu0
        %575 = vmatprep.mubr.f32.mxu0 0.0
        %576 = vmatmul.mubr.f32.gmra.mxu0 %v462
        %v577 = vpop.f32.mrf.mxu0
        %v578 = vadd.f32 %v230, %v577
        %v579 = vpop.f32.mrf.mxu0
        %580 = vmatprep.mubr.f32.mxu0 0.0
        %581 = vmatmul.mubr.f32.gmra.mxu0 %v465
        %v582 = vpop.f32.mrf.mxu0
        %v583 = vadd.f32 %v230, %v582
        %v584 = vpop.f32.mrf.mxu0
        %585 = vmatprep.mubr.f32.mxu0 0.0
        %586 = vmatmul.mubr.f32.gmra.mxu0 %v468
        %v587 = vpop.f32.mrf.mxu0
        %v588 = vadd.f32 %v230, %v587
        %v589 = vpop.f32.mrf.mxu0
        %590 = vmatprep.mubr.f32.mxu0 0.0
        %591 = vmatmul.mubr.f32.gmra.mxu0 %v471
        %v592 = vpop.f32.mrf.mxu0
        %v593 = vadd.f32 %v230, %v592
        %v594 = vpop.f32.mrf.mxu0
        %595 = vmatprep.mubr.f32.mxu0 0.0
        %596 = vmatmul.mubr.f32.gmra.mxu0 %v474
        %v597 = vpop.f32.mrf.mxu0
        %v598 = vadd.f32 %v230, %v597
        %v599 = vpop.f32.mrf.mxu0
        %600 = vmatprep.mubr.f32.mxu0 0.0
        %601 = vmatmul.mubr.f32.gmra.mxu0 %v477
        %v602 = vpop.f32.mrf.mxu0
        %v603 = vadd.f32 %v230, %v602
        %v604 = vpop.f32.mrf.mxu0
        %605 = vmatprep.mubr.f32.mxu0 0.0
        %606 = vmatmul.mubr.f32.gmra.mxu0 %v480
        %v607 = vpop.f32.mrf.mxu0
        %v608 = vadd.f32 %v230, %v607
        %v609 = vpop.f32.mrf.mxu0
        %610 = vmatprep.mubr.f32.mxu0 0.0
        %611 = vmatmul.mubr.f32.gmra.mxu0 %v483
        %v612 = vpop.f32.mrf.mxu0
        %v613 = vadd.f32 %v230, %v612
        %v614 = vpop.f32.mrf.mxu0
        %615 = vmatprep.mubr.f32.mxu0 0.0
        %616 = vmatmul.mubr.f32.gmra.mxu0 %v486
        %v617 = vpop.f32.mrf.mxu0
        %v618 = vadd.f32 %v230, %v617
        %v619 = vpop.f32.mrf.mxu0
        %620 = vmatprep.mubr.f32.mxu0 0.0
        %621 = vmatmul.mubr.f32.gmra.mxu0 %v489
        %v622 = vpop.f32.mrf.mxu0
        %v623 = vadd.f32 %v230, %v622
        %v624 = vpop.f32.mrf.mxu0
        %625 = vmatprep.mubr.f32.mxu0 0.0
        %626 = vmatmul.mubr.f32.gmra.mxu0 %v492
        %v627 = vpop.f32.mrf.mxu0
        %v628 = vadd.f32 %v230, %v627
        %v629 = vpop.f32.mrf.mxu0
        %630 = vmatprep.mubr.f32.mxu0 0.0
        %631 = vmatmul.mubr.f32.gmra.mxu0 %v495
        %v632 = vpop.f32.mrf.mxu0
        %v633 = vadd.f32 %v230, %v632
        %v634 = vpop.f32.mrf.mxu0
        %635 = vmatprep.mubr.f32.mxu0 0.0
        %636 = vmatmul.mubr.f32.gmra.mxu0 %v498
        %v637 = vpop.f32.mrf.mxu0
        %v638 = vadd.f32 %v230, %v637
        %v639 = vpop.f32.mrf.mxu0
        %640 = vmatprep.mubr.f32.mxu0 0.0
        %641 = vmatmul.mubr.f32.gmra.mxu0 %v501
        %v642 = vpop.f32.mrf.mxu0
        %v643 = vadd.f32 %v230, %v642
        %v644 = vpop.f32.mrf.mxu0
        %645 = vmatprep.mubr.f32.mxu0 0.0
        %646 = vmatmul.mubr.f32.gmra.mxu0 %v504
        %v647 = vpop.f32.mrf.mxu0
        %v648 = vadd.f32 %v230, %v647
        %v649 = vpop.f32.mrf.mxu0
        %650 = vdwg.mxu0
        %v651 = vmax.f32 %v573, 0.0
        %v652 = vmax.f32 %v578, 0.0
        %v653 = vmax.f32 %v583, 0.0
        %v654 = vmax.f32 %v588, 0.0
        %v655 = vmax.f32 %v593, 0.0
        %v656 = vmax.f32 %v598, 0.0
        %v657 = vmax.f32 %v603, 0.0
        %v658 = vmax.f32 %v608, 0.0
        %v659 = vmax.f32 %v613, 0.0
        %v660 = vmax.f32 %v618, 0.0
        %v661 = vmax.f32 %v623, 0.0
        %v662 = vmax.f32 %v628, 0.0
        %v663 = vmax.f32 %v633, 0.0
        %v664 = vmax.f32 %v638, 0.0
        %v665 = vmax.f32 %v643, 0.0
        %v666 = vmax.f32 %v648, 0.0
        %s667 = scalar_lea.vmem [#allocation2], 128
        %v668 = vld [vmem:[%s667] sm:$0xff]
        %v669 = vld [vmem:[%s667 + $0x8] sm:$0xff]
        %v670 = vld [vmem:[%s667 + $0x10] sm:$0xff]
        %v671 = vld [vmem:[%s667 + $0x18] sm:$0xff]
        %v672 = vld [vmem:[%s667 + $0x20] sm:$0xff]
        %v673 = vld [vmem:[%s667 + $0x28] sm:$0xff]
        %v674 = vld [vmem:[%s667 + $0x30] sm:$0xff]
        %v675 = vld [vmem:[%s667 + $0x38] sm:$0xff]
        %v676 = vld [vmem:[%s667 + $0x40] sm:$0xff]
        %v677 = vld [vmem:[%s667 + $0x48] sm:$0xff]
        %v678 = vld [vmem:[%s667 + $0x50] sm:$0xff]
        %v679 = vld [vmem:[%s667 + $0x58] sm:$0xff]
        %v680 = vld [vmem:[%s667 + $0x60] sm:$0xff]
        %v681 = vld [vmem:[%s667 + $0x68] sm:$0xff]
        %v682 = vld [vmem:[%s667 + $0x70] sm:$0xff]
        %v683 = vld [vmem:[%s667 + $0x78] sm:$0xff]
        %s684 = scalar_lea.vmem %s2, 1
        %v685 = vld [vmem:[%s684] sm:$0x1]
        %v687 = vlaneseq
        %v688 = vshrl.u32 %v687, 7
        %v689 = vsub.s32 0, %v688
        %v690 = vrot.slane %v685, %v689
        %692 = vmatprep.subr.mxu0 0.0
        %693 = vmatpush1.msra.mxu0 %v683
        %694 = vmatprep.subr.mxu0 0.0
        %695 = vmatpush1.msra.mxu0 %v682
        %696 = vmatprep.subr.mxu0 0.0
        %697 = vmatpush1.msra.mxu0 %v681
        %698 = vmatprep.subr.mxu0 0.0
        %699 = vmatpush1.msra.mxu0 %v680
        %700 = vmatprep.subr.mxu0 0.0
        %701 = vmatpush1.msra.mxu0 %v679
        %702 = vmatprep.subr.mxu0 0.0
        %703 = vmatpush1.msra.mxu0 %v678
        %704 = vmatprep.subr.mxu0 0.0
        %705 = vmatpush1.msra.mxu0 %v677
        %706 = vmatprep.subr.mxu0 0.0
        %707 = vmatpush1.msra.mxu0 %v676
        %708 = vmatprep.subr.mxu0 0.0
        %709 = vmatpush1.msra.mxu0 %v675
        %710 = vmatprep.subr.mxu0 0.0
        %711 = vmatpush1.msra.mxu0 %v674
        %712 = vmatprep.subr.mxu0 0.0
        %713 = vmatpush1.msra.mxu0 %v673
        %714 = vmatprep.subr.mxu0 0.0
        %715 = vmatpush1.msra.mxu0 %v672
        %716 = vmatprep.subr.mxu0 0.0
        %717 = vmatpush1.msra.mxu0 %v671
        %718 = vmatprep.subr.mxu0 0.0
        %719 = vmatpush1.msra.mxu0 %v670
        %720 = vmatprep.subr.mxu0 0.0
        %721 = vmatpush1.msra.mxu0 %v669
        %722 = vmatprep.subr.mxu0 0.0
        %723 = vmatpush1.msra.mxu0 %v668
        %724 = vmatprep.subr.mxu0 0.0
        %725 = vmatpush2.msra.mxu0 0.0
        %726 = vmatprep.subr.mxu0 0.0
        %727 = vmatpush2.msra.mxu0 0.0
        %728 = vmatprep.subr.mxu0 0.0
        %729 = vmatpush2.msra.mxu0 0.0
        %730 = vmatprep.subr.mxu0 0.0
        %731 = vmatpush2.msra.mxu0 0.0
        %732 = vmatprep.subr.mxu0 0.0
        %733 = vmatpush2.msra.mxu0 0.0
        %734 = vmatprep.subr.mxu0 0.0
        %735 = vmatpush2.msra.mxu0 0.0
        %736 = vmatprep.subr.mxu0 0.0
        %737 = vmatpush2.msra.mxu0 0.0
        %738 = vmatprep.subr.mxu0 0.0
        %739 = vmatpush2.msra.mxu0 0.0
        %740 = vmatprep.subr.mxu0 0.0
        %741 = vmatpush2.msra.mxu0 0.0
        %742 = vmatprep.subr.mxu0 0.0
        %743 = vmatpush2.msra.mxu0 0.0
        %744 = vmatprep.subr.mxu0 0.0
        %745 = vmatpush2.msra.mxu0 0.0
        %746 = vmatprep.subr.mxu0 0.0
        %747 = vmatpush2.msra.mxu0 0.0
        %748 = vmatprep.subr.mxu0 0.0
        %749 = vmatpush2.msra.mxu0 0.0
        %750 = vmatprep.subr.mxu0 0.0
        %751 = vmatpush2.msra.mxu0 0.0
        %752 = vmatprep.subr.mxu0 0.0
        %753 = vmatpush2.msra.mxu0 0.0
        %754 = vmatprep.subr.mxu0 0.0
        %755 = vmatpush2.msra.mxu0 0.0
        %756 = vmatprep.mubr.f32.mxu0 0.0
        %757 = vmatmul.mubr.f32.gmra.mxu0 %v426
        %v758 = vpop.f32.mrf.mxu0
        %v759 = vadd.f32 %v690, %v758
        %v760 = vpop.f32.mrf.mxu0
        %761 = vmatprep.mubr.f32.mxu0 0.0
        %762 = vmatmul.mubr.f32.gmra.mxu0 %v427
        %v763 = vpop.f32.mrf.mxu0
        %v764 = vadd.f32 %v690, %v763
        %v765 = vpop.f32.mrf.mxu0
        %766 = vmatprep.mubr.f32.mxu0 0.0
        %767 = vmatmul.mubr.f32.gmra.mxu0 %v428
        %v768 = vpop.f32.mrf.mxu0
        %v769 = vadd.f32 %v690, %v768
        %v770 = vpop.f32.mrf.mxu0
        %771 = vmatprep.mubr.f32.mxu0 0.0
        %772 = vmatmul.mubr.f32.gmra.mxu0 %v429
        %v773 = vpop.f32.mrf.mxu0
        %v774 = vadd.f32 %v690, %v773
        %v775 = vpop.f32.mrf.mxu0
        %776 = vmatprep.mubr.f32.mxu0 0.0
        %777 = vmatmul.mubr.f32.gmra.mxu0 %v430
        %v778 = vpop.f32.mrf.mxu0
        %v779 = vadd.f32 %v690, %v778
        %v780 = vpop.f32.mrf.mxu0
        %781 = vmatprep.mubr.f32.mxu0 0.0
        %782 = vmatmul.mubr.f32.gmra.mxu0 %v431
        %v783 = vpop.f32.mrf.mxu0
        %v784 = vadd.f32 %v690, %v783
        %v785 = vpop.f32.mrf.mxu0
        %786 = vmatprep.mubr.f32.mxu0 0.0
        %787 = vmatmul.mubr.f32.gmra.mxu0 %v432
        %v788 = vpop.f32.mrf.mxu0
        %v789 = vadd.f32 %v690, %v788
        %v790 = vpop.f32.mrf.mxu0
        %791 = vmatprep.mubr.f32.mxu0 0.0
        %792 = vmatmul.mubr.f32.gmra.mxu0 %v433
        %v793 = vpop.f32.mrf.mxu0
        %v794 = vadd.f32 %v690, %v793
        %v795 = vpop.f32.mrf.mxu0
        %796 = vmatprep.mubr.f32.mxu0 0.0
        %797 = vmatmul.mubr.f32.gmra.mxu0 %v434
        %v798 = vpop.f32.mrf.mxu0
        %v799 = vadd.f32 %v690, %v798
        %v800 = vpop.f32.mrf.mxu0
        %801 = vmatprep.mubr.f32.mxu0 0.0
        %802 = vmatmul.mubr.f32.gmra.mxu0 %v435
        %v803 = vpop.f32.mrf.mxu0
        %v804 = vadd.f32 %v690, %v803
        %v805 = vpop.f32.mrf.mxu0
        %806 = vmatprep.mubr.f32.mxu0 0.0
        %807 = vmatmul.mubr.f32.gmra.mxu0 %v436
        %v808 = vpop.f32.mrf.mxu0
        %v809 = vadd.f32 %v690, %v808
        %v810 = vpop.f32.mrf.mxu0
        %811 = vmatprep.mubr.f32.mxu0 0.0
        %812 = vmatmul.mubr.f32.gmra.mxu0 %v437
        %v813 = vpop.f32.mrf.mxu0
        %v814 = vadd.f32 %v690, %v813
        %v815 = vpop.f32.mrf.mxu0
        %816 = vmatprep.mubr.f32.mxu0 0.0
        %817 = vmatmul.mubr.f32.gmra.mxu0 %v438
        %v818 = vpop.f32.mrf.mxu0
        %v819 = vadd.f32 %v690, %v818
        %v820 = vpop.f32.mrf.mxu0
        %821 = vmatprep.mubr.f32.mxu0 0.0
        %822 = vmatmul.mubr.f32.gmra.mxu0 %v439
        %v823 = vpop.f32.mrf.mxu0
        %v824 = vadd.f32 %v690, %v823
        %v825 = vpop.f32.mrf.mxu0
        %826 = vmatprep.mubr.f32.mxu0 0.0
        %827 = vmatmul.mubr.f32.gmra.mxu0 %v440
        %v828 = vpop.f32.mrf.mxu0
        %v829 = vadd.f32 %v690, %v828
        %v830 = vpop.f32.mrf.mxu0
        %831 = vmatprep.mubr.f32.mxu0 0.0
        %832 = vmatmul.mubr.f32.gmra.mxu0 %v441
        %v833 = vpop.f32.mrf.mxu0
        %v834 = vadd.f32 %v690, %v833
        %v835 = vpop.f32.mrf.mxu0
        %836 = vdwg.mxu0
        %v837 = vmax.f32 %v759, 0.0
        %v838 = vmax.f32 %v764, 0.0
        %v839 = vmax.f32 %v769, 0.0
        %v840 = vmax.f32 %v774, 0.0
        %v841 = vmax.f32 %v779, 0.0
        %v842 = vmax.f32 %v784, 0.0
        %v843 = vmax.f32 %v789, 0.0
        %v844 = vmax.f32 %v794, 0.0
        %v845 = vmax.f32 %v799, 0.0
        %v846 = vmax.f32 %v804, 0.0
        %v847 = vmax.f32 %v809, 0.0
        %v848 = vmax.f32 %v814, 0.0
        %v849 = vmax.f32 %v819, 0.0
        %v850 = vmax.f32 %v824, 0.0
        %v851 = vmax.f32 %v829, 0.0
        %v852 = vmax.f32 %v834, 0.0
        %853 = vmatprep.subr.mxu0 0.0
        %854 = vmatpush1.msra.mxu0 %v683
        %855 = vmatprep.subr.mxu0 0.0
        %856 = vmatpush1.msra.mxu0 %v682
        %857 = vmatprep.subr.mxu0 0.0
        %858 = vmatpush1.msra.mxu0 %v681
        %859 = vmatprep.subr.mxu0 0.0
        %860 = vmatpush1.msra.mxu0 %v680
        %861 = vmatprep.subr.mxu0 0.0
        %862 = vmatpush1.msra.mxu0 %v679
        %863 = vmatprep.subr.mxu0 0.0
        %864 = vmatpush1.msra.mxu0 %v678
        %865 = vmatprep.subr.mxu0 0.0
        %866 = vmatpush1.msra.mxu0 %v677
        %867 = vmatprep.subr.mxu0 0.0
        %868 = vmatpush1.msra.mxu0 %v676
        %869 = vmatprep.subr.mxu0 0.0
        %870 = vmatpush1.msra.mxu0 %v675
        %871 = vmatprep.subr.mxu0 0.0
        %872 = vmatpush1.msra.mxu0 %v674
        %873 = vmatprep.subr.mxu0 0.0
        %874 = vmatpush1.msra.mxu0 %v673
        %875 = vmatprep.subr.mxu0 0.0
        %876 = vmatpush1.msra.mxu0 %v672
        %877 = vmatprep.subr.mxu0 0.0
        %878 = vmatpush1.msra.mxu0 %v671
        %879 = vmatprep.subr.mxu0 0.0
        %880 = vmatpush1.msra.mxu0 %v670
        %881 = vmatprep.subr.mxu0 0.0
        %882 = vmatpush1.msra.mxu0 %v669
        %883 = vmatprep.subr.mxu0 0.0
        %884 = vmatpush1.msra.mxu0 %v668
        %885 = vmatprep.subr.mxu0 0.0
        %886 = vmatpush2.msra.mxu0 0.0
        %887 = vmatprep.subr.mxu0 0.0
        %888 = vmatpush2.msra.mxu0 0.0
        %889 = vmatprep.subr.mxu0 0.0
        %890 = vmatpush2.msra.mxu0 0.0
        %891 = vmatprep.subr.mxu0 0.0
        %892 = vmatpush2.msra.mxu0 0.0
        %893 = vmatprep.subr.mxu0 0.0
        %894 = vmatpush2.msra.mxu0 0.0
        %895 = vmatprep.subr.mxu0 0.0
        %896 = vmatpush2.msra.mxu0 0.0
        %897 = vmatprep.subr.mxu0 0.0
        %898 = vmatpush2.msra.mxu0 0.0
        %899 = vmatprep.subr.mxu0 0.0
        %900 = vmatpush2.msra.mxu0 0.0
        %901 = vmatprep.subr.mxu0 0.0
        %902 = vmatpush2.msra.mxu0 0.0
        %903 = vmatprep.subr.mxu0 0.0
        %904 = vmatpush2.msra.mxu0 0.0
        %905 = vmatprep.subr.mxu0 0.0
        %906 = vmatpush2.msra.mxu0 0.0
        %907 = vmatprep.subr.mxu0 0.0
        %908 = vmatpush2.msra.mxu0 0.0
        %909 = vmatprep.subr.mxu0 0.0
        %910 = vmatpush2.msra.mxu0 0.0
        %911 = vmatprep.subr.mxu0 0.0
        %912 = vmatpush2.msra.mxu0 0.0
        %913 = vmatprep.subr.mxu0 0.0
        %914 = vmatpush2.msra.mxu0 0.0
        %915 = vmatprep.subr.mxu0 0.0
        %916 = vmatpush2.msra.mxu0 0.0
        %917 = vmatprep.mubr.f32.mxu0 0.0
        %918 = vmatmul.mubr.f32.gmra.mxu0 %v651
        %v919 = vpop.f32.mrf.mxu0
        %v920 = vadd.f32 %v690, %v919
        %v921 = vpop.f32.mrf.mxu0
        %922 = vmatprep.mubr.f32.mxu0 0.0
        %923 = vmatmul.mubr.f32.gmra.mxu0 %v652
        %v924 = vpop.f32.mrf.mxu0
        %v925 = vadd.f32 %v690, %v924
        %v926 = vpop.f32.mrf.mxu0
        %927 = vmatprep.mubr.f32.mxu0 0.0
        %928 = vmatmul.mubr.f32.gmra.mxu0 %v653
        %v929 = vpop.f32.mrf.mxu0
        %v930 = vadd.f32 %v690, %v929
        %v931 = vpop.f32.mrf.mxu0
        %932 = vmatprep.mubr.f32.mxu0 0.0
        %933 = vmatmul.mubr.f32.gmra.mxu0 %v654
        %v934 = vpop.f32.mrf.mxu0
        %v935 = vadd.f32 %v690, %v934
        %v936 = vpop.f32.mrf.mxu0
        %937 = vmatprep.mubr.f32.mxu0 0.0
        %938 = vmatmul.mubr.f32.gmra.mxu0 %v655
        %v939 = vpop.f32.mrf.mxu0
        %v940 = vadd.f32 %v690, %v939
        %v941 = vpop.f32.mrf.mxu0
        %942 = vmatprep.mubr.f32.mxu0 0.0
        %943 = vmatmul.mubr.f32.gmra.mxu0 %v656
        %v944 = vpop.f32.mrf.mxu0
        %v945 = vadd.f32 %v690, %v944
        %v946 = vpop.f32.mrf.mxu0
        %947 = vmatprep.mubr.f32.mxu0 0.0
        %948 = vmatmul.mubr.f32.gmra.mxu0 %v657
        %v949 = vpop.f32.mrf.mxu0
        %v950 = vadd.f32 %v690, %v949
        %v951 = vpop.f32.mrf.mxu0
        %952 = vmatprep.mubr.f32.mxu0 0.0
        %953 = vmatmul.mubr.f32.gmra.mxu0 %v658
        %v954 = vpop.f32.mrf.mxu0
        %v955 = vadd.f32 %v690, %v954
        %v956 = vpop.f32.mrf.mxu0
        %957 = vmatprep.mubr.f32.mxu0 0.0
        %958 = vmatmul.mubr.f32.gmra.mxu0 %v659
        %v959 = vpop.f32.mrf.mxu0
        %v960 = vadd.f32 %v690, %v959
        %v961 = vpop.f32.mrf.mxu0
        %962 = vmatprep.mubr.f32.mxu0 0.0
        %963 = vmatmul.mubr.f32.gmra.mxu0 %v660
        %v964 = vpop.f32.mrf.mxu0
        %v965 = vadd.f32 %v690, %v964
        %v966 = vpop.f32.mrf.mxu0
        %967 = vmatprep.mubr.f32.mxu0 0.0
        %968 = vmatmul.mubr.f32.gmra.mxu0 %v661
        %v969 = vpop.f32.mrf.mxu0
        %v970 = vadd.f32 %v690, %v969
        %v971 = vpop.f32.mrf.mxu0
        %972 = vmatprep.mubr.f32.mxu0 0.0
        %973 = vmatmul.mubr.f32.gmra.mxu0 %v662
        %v974 = vpop.f32.mrf.mxu0
        %v975 = vadd.f32 %v690, %v974
        %v976 = vpop.f32.mrf.mxu0
        %977 = vmatprep.mubr.f32.mxu0 0.0
        %978 = vmatmul.mubr.f32.gmra.mxu0 %v663
        %v979 = vpop.f32.mrf.mxu0
        %v980 = vadd.f32 %v690, %v979
        %v981 = vpop.f32.mrf.mxu0
        %982 = vmatprep.mubr.f32.mxu0 0.0
        %983 = vmatmul.mubr.f32.gmra.mxu0 %v664
        %v984 = vpop.f32.mrf.mxu0
        %v985 = vadd.f32 %v690, %v984
        %v986 = vpop.f32.mrf.mxu0
        %987 = vmatprep.mubr.f32.mxu0 0.0
        %988 = vmatmul.mubr.f32.gmra.mxu0 %v665
        %v989 = vpop.f32.mrf.mxu0
        %v990 = vadd.f32 %v690, %v989
        %v991 = vpop.f32.mrf.mxu0
        %992 = vmatprep.mubr.f32.mxu0 0.0
        %993 = vmatmul.mubr.f32.gmra.mxu0 %v666
        %v994 = vpop.f32.mrf.mxu0
        %v995 = vadd.f32 %v690, %v994
        %v996 = vpop.f32.mrf.mxu0
        %997 = vdwg.mxu0
        %v998 = vmax.f32 %v920, 0.0
        %v999 = vmax.f32 %v925, 0.0
        %v1000 = vmax.f32 %v930, 0.0
        %v1001 = vmax.f32 %v935, 0.0
        %v1002 = vmax.f32 %v940, 0.0
        %v1003 = vmax.f32 %v945, 0.0
        %v1004 = vmax.f32 %v950, 0.0
        %v1005 = vmax.f32 %v955, 0.0
        %v1006 = vmax.f32 %v960, 0.0
        %v1007 = vmax.f32 %v965, 0.0
        %v1008 = vmax.f32 %v970, 0.0
        %v1009 = vmax.f32 %v975, 0.0
        %v1010 = vmax.f32 %v980, 0.0
        %v1011 = vmax.f32 %v985, 0.0
        %v1012 = vmax.f32 %v990, 0.0
        %v1013 = vmax.f32 %v995, 0.0
        %s1014 = scalar_lea.vmem [#allocation2], 256
        %v1015 = vld [vmem:[%s1014] sm:$0xff]
        %v1016 = vld [vmem:[%s1014 + $0x8] sm:$0xff]
        %v1017 = vld [vmem:[%s1014 + $0x10] sm:$0xff]
        %v1018 = vld [vmem:[%s1014 + $0x18] sm:$0xff]
        %v1019 = vld [vmem:[%s1014 + $0x20] sm:$0xff]
        %v1020 = vld [vmem:[%s1014 + $0x28] sm:$0xff]
        %v1021 = vld [vmem:[%s1014 + $0x30] sm:$0xff]
        %v1022 = vld [vmem:[%s1014 + $0x38] sm:$0xff]
        %v1023 = vld [vmem:[%s1014 + $0x40] sm:$0xff]
        %v1024 = vld [vmem:[%s1014 + $0x48] sm:$0xff]
        %v1025 = vld [vmem:[%s1014 + $0x50] sm:$0xff]
        %v1026 = vld [vmem:[%s1014 + $0x58] sm:$0xff]
        %v1027 = vld [vmem:[%s1014 + $0x60] sm:$0xff]
        %v1028 = vld [vmem:[%s1014 + $0x68] sm:$0xff]
        %v1029 = vld [vmem:[%s1014 + $0x70] sm:$0xff]
        %v1030 = vld [vmem:[%s1014 + $0x78] sm:$0xff]
        %s1031 = scalar_lea.vmem %s2, 2
        %v1032 = vld [vmem:[%s1031] sm:$0x1]
        %v1034 = vlaneseq
        %v1035 = vshrl.u32 %v1034, 7
        %v1036 = vsub.s32 0, %v1035
        %v1037 = vrot.slane %v1032, %v1036
        %1039 = vmatprep.subr.mxu0 0.0
        %1040 = vmatpush1.msra.mxu0 %v1030
        %1041 = vmatprep.subr.mxu0 0.0
        %1042 = vmatpush1.msra.mxu0 %v1029
        %1043 = vmatprep.subr.mxu0 0.0
        %1044 = vmatpush1.msra.mxu0 %v1028
        %1045 = vmatprep.subr.mxu0 0.0
        %1046 = vmatpush1.msra.mxu0 %v1027
        %1047 = vmatprep.subr.mxu0 0.0
        %1048 = vmatpush1.msra.mxu0 %v1026
        %1049 = vmatprep.subr.mxu0 0.0
        %1050 = vmatpush1.msra.mxu0 %v1025
        %1051 = vmatprep.subr.mxu0 0.0
        %1052 = vmatpush1.msra.mxu0 %v1024
        %1053 = vmatprep.subr.mxu0 0.0
        %1054 = vmatpush1.msra.mxu0 %v1023
        %1055 = vmatprep.subr.mxu0 0.0
        %1056 = vmatpush1.msra.mxu0 %v1022
        %1057 = vmatprep.subr.mxu0 0.0
        %1058 = vmatpush1.msra.mxu0 %v1021
        %1059 = vmatprep.subr.mxu0 0.0
        %1060 = vmatpush1.msra.mxu0 %v1020
        %1061 = vmatprep.subr.mxu0 0.0
        %1062 = vmatpush1.msra.mxu0 %v1019
        %1063 = vmatprep.subr.mxu0 0.0
        %1064 = vmatpush1.msra.mxu0 %v1018
        %1065 = vmatprep.subr.mxu0 0.0
        %1066 = vmatpush1.msra.mxu0 %v1017
        %1067 = vmatprep.subr.mxu0 0.0
        %1068 = vmatpush1.msra.mxu0 %v1016
        %1069 = vmatprep.subr.mxu0 0.0
        %1070 = vmatpush1.msra.mxu0 %v1015
        %1071 = vmatprep.subr.mxu0 0.0
        %1072 = vmatpush2.msra.mxu0 0.0
        %1073 = vmatprep.subr.mxu0 0.0
        %1074 = vmatpush2.msra.mxu0 0.0
        %1075 = vmatprep.subr.mxu0 0.0
        %1076 = vmatpush2.msra.mxu0 0.0
        %1077 = vmatprep.subr.mxu0 0.0
        %1078 = vmatpush2.msra.mxu0 0.0
        %1079 = vmatprep.subr.mxu0 0.0
        %1080 = vmatpush2.msra.mxu0 0.0
        %1081 = vmatprep.subr.mxu0 0.0
        %1082 = vmatpush2.msra.mxu0 0.0
        %1083 = vmatprep.subr.mxu0 0.0
        %1084 = vmatpush2.msra.mxu0 0.0
        %1085 = vmatprep.subr.mxu0 0.0
        %1086 = vmatpush2.msra.mxu0 0.0
        %1087 = vmatprep.subr.mxu0 0.0
        %1088 = vmatpush2.msra.mxu0 0.0
        %1089 = vmatprep.subr.mxu0 0.0
        %1090 = vmatpush2.msra.mxu0 0.0
        %1091 = vmatprep.subr.mxu0 0.0
        %1092 = vmatpush2.msra.mxu0 0.0
        %1093 = vmatprep.subr.mxu0 0.0
        %1094 = vmatpush2.msra.mxu0 0.0
        %1095 = vmatprep.subr.mxu0 0.0
        %1096 = vmatpush2.msra.mxu0 0.0
        %1097 = vmatprep.subr.mxu0 0.0
        %1098 = vmatpush2.msra.mxu0 0.0
        %1099 = vmatprep.subr.mxu0 0.0
        %1100 = vmatpush2.msra.mxu0 0.0
        %1101 = vmatprep.subr.mxu0 0.0
        %1102 = vmatpush2.msra.mxu0 0.0
        %1103 = vmatprep.mubr.f32.mxu0 0.0
        %1104 = vmatmul.mubr.f32.gmra.mxu0 %v837
        %v1105 = vpop.f32.mrf.mxu0
        %v1106 = vadd.f32 %v1037, %v1105
        %v1107 = vpop.f32.mrf.mxu0
        %1108 = vmatprep.mubr.f32.mxu0 0.0
        %1109 = vmatmul.mubr.f32.gmra.mxu0 %v838
        %v1110 = vpop.f32.mrf.mxu0
        %v1111 = vadd.f32 %v1037, %v1110
        %v1112 = vpop.f32.mrf.mxu0
        %1113 = vmatprep.mubr.f32.mxu0 0.0
        %1114 = vmatmul.mubr.f32.gmra.mxu0 %v839
        %v1115 = vpop.f32.mrf.mxu0
        %v1116 = vadd.f32 %v1037, %v1115
        %v1117 = vpop.f32.mrf.mxu0
        %1118 = vmatprep.mubr.f32.mxu0 0.0
        %1119 = vmatmul.mubr.f32.gmra.mxu0 %v840
        %v1120 = vpop.f32.mrf.mxu0
        %v1121 = vadd.f32 %v1037, %v1120
        %v1122 = vpop.f32.mrf.mxu0
        %1123 = vmatprep.mubr.f32.mxu0 0.0
        %1124 = vmatmul.mubr.f32.gmra.mxu0 %v841
        %v1125 = vpop.f32.mrf.mxu0
        %v1126 = vadd.f32 %v1037, %v1125
        %v1127 = vpop.f32.mrf.mxu0
        %1128 = vmatprep.mubr.f32.mxu0 0.0
        %1129 = vmatmul.mubr.f32.gmra.mxu0 %v842
        %v1130 = vpop.f32.mrf.mxu0
        %v1131 = vadd.f32 %v1037, %v1130
        %v1132 = vpop.f32.mrf.mxu0
        %1133 = vmatprep.mubr.f32.mxu0 0.0
        %1134 = vmatmul.mubr.f32.gmra.mxu0 %v843
        %v1135 = vpop.f32.mrf.mxu0
        %v1136 = vadd.f32 %v1037, %v1135
        %v1137 = vpop.f32.mrf.mxu0
        %1138 = vmatprep.mubr.f32.mxu0 0.0
        %1139 = vmatmul.mubr.f32.gmra.mxu0 %v844
        %v1140 = vpop.f32.mrf.mxu0
        %v1141 = vadd.f32 %v1037, %v1140
        %v1142 = vpop.f32.mrf.mxu0
        %1143 = vmatprep.mubr.f32.mxu0 0.0
        %1144 = vmatmul.mubr.f32.gmra.mxu0 %v845
        %v1145 = vpop.f32.mrf.mxu0
        %v1146 = vadd.f32 %v1037, %v1145
        %v1147 = vpop.f32.mrf.mxu0
        %1148 = vmatprep.mubr.f32.mxu0 0.0
        %1149 = vmatmul.mubr.f32.gmra.mxu0 %v846
        %v1150 = vpop.f32.mrf.mxu0
        %v1151 = vadd.f32 %v1037, %v1150
        %v1152 = vpop.f32.mrf.mxu0
        %1153 = vmatprep.mubr.f32.mxu0 0.0
        %1154 = vmatmul.mubr.f32.gmra.mxu0 %v847
        %v1155 = vpop.f32.mrf.mxu0
        %v1156 = vadd.f32 %v1037, %v1155
        %v1157 = vpop.f32.mrf.mxu0
        %1158 = vmatprep.mubr.f32.mxu0 0.0
        %1159 = vmatmul.mubr.f32.gmra.mxu0 %v848
        %v1160 = vpop.f32.mrf.mxu0
        %v1161 = vadd.f32 %v1037, %v1160
        %v1162 = vpop.f32.mrf.mxu0
        %1163 = vmatprep.mubr.f32.mxu0 0.0
        %1164 = vmatmul.mubr.f32.gmra.mxu0 %v849
        %v1165 = vpop.f32.mrf.mxu0
        %v1166 = vadd.f32 %v1037, %v1165
        %v1167 = vpop.f32.mrf.mxu0
        %1168 = vmatprep.mubr.f32.mxu0 0.0
        %1169 = vmatmul.mubr.f32.gmra.mxu0 %v850
        %v1170 = vpop.f32.mrf.mxu0
        %v1171 = vadd.f32 %v1037, %v1170
        %v1172 = vpop.f32.mrf.mxu0
        %1173 = vmatprep.mubr.f32.mxu0 0.0
        %1174 = vmatmul.mubr.f32.gmra.mxu0 %v851
        %v1175 = vpop.f32.mrf.mxu0
        %v1176 = vadd.f32 %v1037, %v1175
        %v1177 = vpop.f32.mrf.mxu0
        %1178 = vmatprep.mubr.f32.mxu0 0.0
        %1179 = vmatmul.mubr.f32.gmra.mxu0 %v852
        %v1180 = vpop.f32.mrf.mxu0
        %v1181 = vadd.f32 %v1037, %v1180
        %v1182 = vpop.f32.mrf.mxu0
        %1183 = vdwg.mxu0
        %1184 = vmatprep.subr.mxu0 0.0
        %1185 = vmatpush1.msra.mxu0 %v1030
        %1186 = vmatprep.subr.mxu0 0.0
        %1187 = vmatpush1.msra.mxu0 %v1029
        %1188 = vmatprep.subr.mxu0 0.0
        %1189 = vmatpush1.msra.mxu0 %v1028
        %1190 = vmatprep.subr.mxu0 0.0
        %1191 = vmatpush1.msra.mxu0 %v1027
        %1192 = vmatprep.subr.mxu0 0.0
        %1193 = vmatpush1.msra.mxu0 %v1026
        %1194 = vmatprep.subr.mxu0 0.0
        %1195 = vmatpush1.msra.mxu0 %v1025
        %1196 = vmatprep.subr.mxu0 0.0
        %1197 = vmatpush1.msra.mxu0 %v1024
        %1198 = vmatprep.subr.mxu0 0.0
        %1199 = vmatpush1.msra.mxu0 %v1023
        %1200 = vmatprep.subr.mxu0 0.0
        %1201 = vmatpush1.msra.mxu0 %v1022
        %1202 = vmatprep.subr.mxu0 0.0
        %1203 = vmatpush1.msra.mxu0 %v1021
        %1204 = vmatprep.subr.mxu0 0.0
        %1205 = vmatpush1.msra.mxu0 %v1020
        %1206 = vmatprep.subr.mxu0 0.0
        %1207 = vmatpush1.msra.mxu0 %v1019
        %1208 = vmatprep.subr.mxu0 0.0
        %1209 = vmatpush1.msra.mxu0 %v1018
        %1210 = vmatprep.subr.mxu0 0.0
        %1211 = vmatpush1.msra.mxu0 %v1017
        %1212 = vmatprep.subr.mxu0 0.0
        %1213 = vmatpush1.msra.mxu0 %v1016
        %1214 = vmatprep.subr.mxu0 0.0
        %1215 = vmatpush1.msra.mxu0 %v1015
        %1216 = vmatprep.subr.mxu0 0.0
        %1217 = vmatpush2.msra.mxu0 0.0
        %1218 = vmatprep.subr.mxu0 0.0
        %1219 = vmatpush2.msra.mxu0 0.0
        %1220 = vmatprep.subr.mxu0 0.0
        %1221 = vmatpush2.msra.mxu0 0.0
        %1222 = vmatprep.subr.mxu0 0.0
        %1223 = vmatpush2.msra.mxu0 0.0
        %1224 = vmatprep.subr.mxu0 0.0
        %1225 = vmatpush2.msra.mxu0 0.0
        %1226 = vmatprep.subr.mxu0 0.0
        %1227 = vmatpush2.msra.mxu0 0.0
        %1228 = vmatprep.subr.mxu0 0.0
        %1229 = vmatpush2.msra.mxu0 0.0
        %1230 = vmatprep.subr.mxu0 0.0
        %1231 = vmatpush2.msra.mxu0 0.0
        %1232 = vmatprep.subr.mxu0 0.0
        %1233 = vmatpush2.msra.mxu0 0.0
        %1234 = vmatprep.subr.mxu0 0.0
        %1235 = vmatpush2.msra.mxu0 0.0
        %1236 = vmatprep.subr.mxu0 0.0
        %1237 = vmatpush2.msra.mxu0 0.0
        %1238 = vmatprep.subr.mxu0 0.0
        %1239 = vmatpush2.msra.mxu0 0.0
        %1240 = vmatprep.subr.mxu0 0.0
        %1241 = vmatpush2.msra.mxu0 0.0
        %1242 = vmatprep.subr.mxu0 0.0
        %1243 = vmatpush2.msra.mxu0 0.0
        %1244 = vmatprep.subr.mxu0 0.0
        %1245 = vmatpush2.msra.mxu0 0.0
        %1246 = vmatprep.subr.mxu0 0.0
        %1247 = vmatpush2.msra.mxu0 0.0
        %1248 = vmatprep.mubr.f32.mxu0 0.0
        %1249 = vmatmul.mubr.f32.gmra.mxu0 %v998
        %v1250 = vpop.f32.mrf.mxu0
        %v1251 = vadd.f32 %v1037, %v1250
        %v1252 = vpop.f32.mrf.mxu0
        %1253 = vmatprep.mubr.f32.mxu0 0.0
        %1254 = vmatmul.mubr.f32.gmra.mxu0 %v999
        %v1255 = vpop.f32.mrf.mxu0
        %v1256 = vadd.f32 %v1037, %v1255
        %v1257 = vpop.f32.mrf.mxu0
        %1258 = vmatprep.mubr.f32.mxu0 0.0
        %1259 = vmatmul.mubr.f32.gmra.mxu0 %v1000
        %v1260 = vpop.f32.mrf.mxu0
        %v1261 = vadd.f32 %v1037, %v1260
        %v1262 = vpop.f32.mrf.mxu0
        %1263 = vmatprep.mubr.f32.mxu0 0.0
        %1264 = vmatmul.mubr.f32.gmra.mxu0 %v1001
        %v1265 = vpop.f32.mrf.mxu0
        %v1266 = vadd.f32 %v1037, %v1265
        %v1267 = vpop.f32.mrf.mxu0
        %1268 = vmatprep.mubr.f32.mxu0 0.0
        %1269 = vmatmul.mubr.f32.gmra.mxu0 %v1002
        %v1270 = vpop.f32.mrf.mxu0
        %v1271 = vadd.f32 %v1037, %v1270
        %v1272 = vpop.f32.mrf.mxu0
        %1273 = vmatprep.mubr.f32.mxu0 0.0
        %1274 = vmatmul.mubr.f32.gmra.mxu0 %v1003
        %v1275 = vpop.f32.mrf.mxu0
        %v1276 = vadd.f32 %v1037, %v1275
        %v1277 = vpop.f32.mrf.mxu0
        %1278 = vmatprep.mubr.f32.mxu0 0.0
        %1279 = vmatmul.mubr.f32.gmra.mxu0 %v1004
        %v1280 = vpop.f32.mrf.mxu0
        %v1281 = vadd.f32 %v1037, %v1280
        %v1282 = vpop.f32.mrf.mxu0
        %1283 = vmatprep.mubr.f32.mxu0 0.0
        %1284 = vmatmul.mubr.f32.gmra.mxu0 %v1005
        %v1285 = vpop.f32.mrf.mxu0
        %v1286 = vadd.f32 %v1037, %v1285
        %v1287 = vpop.f32.mrf.mxu0
        %1288 = vmatprep.mubr.f32.mxu0 0.0
        %1289 = vmatmul.mubr.f32.gmra.mxu0 %v1006
        %v1290 = vpop.f32.mrf.mxu0
        %v1291 = vadd.f32 %v1037, %v1290
        %v1292 = vpop.f32.mrf.mxu0
        %1293 = vmatprep.mubr.f32.mxu0 0.0
        %1294 = vmatmul.mubr.f32.gmra.mxu0 %v1007
        %v1295 = vpop.f32.mrf.mxu0
        %v1296 = vadd.f32 %v1037, %v1295
        %v1297 = vpop.f32.mrf.mxu0
        %1298 = vmatprep.mubr.f32.mxu0 0.0
        %1299 = vmatmul.mubr.f32.gmra.mxu0 %v1008
        %v1300 = vpop.f32.mrf.mxu0
        %v1301 = vadd.f32 %v1037, %v1300
        %v1302 = vpop.f32.mrf.mxu0
        %1303 = vmatprep.mubr.f32.mxu0 0.0
        %1304 = vmatmul.mubr.f32.gmra.mxu0 %v1009
        %v1305 = vpop.f32.mrf.mxu0
        %v1306 = vadd.f32 %v1037, %v1305
        %v1307 = vpop.f32.mrf.mxu0
        %1308 = vmatprep.mubr.f32.mxu0 0.0
        %1309 = vmatmul.mubr.f32.gmra.mxu0 %v1010
        %v1310 = vpop.f32.mrf.mxu0
        %v1311 = vadd.f32 %v1037, %v1310
        %v1312 = vpop.f32.mrf.mxu0
        %1313 = vmatprep.mubr.f32.mxu0 0.0
        %1314 = vmatmul.mubr.f32.gmra.mxu0 %v1011
        %v1315 = vpop.f32.mrf.mxu0
        %v1316 = vadd.f32 %v1037, %v1315
        %v1317 = vpop.f32.mrf.mxu0
        %1318 = vmatprep.mubr.f32.mxu0 0.0
        %1319 = vmatmul.mubr.f32.gmra.mxu0 %v1012
        %v1320 = vpop.f32.mrf.mxu0
        %v1321 = vadd.f32 %v1037, %v1320
        %v1322 = vpop.f32.mrf.mxu0
        %1323 = vmatprep.mubr.f32.mxu0 0.0
        %1324 = vmatmul.mubr.f32.gmra.mxu0 %v1013
        %v1325 = vpop.f32.mrf.mxu0
        %v1326 = vadd.f32 %v1037, %v1325
        %v1327 = vpop.f32.mrf.mxu0
        %1328 = vdwg.mxu0
        %s1329 = scalar_lea.vmem [#allocation2], 384
        %v1330 = vld [vmem:[%s1329] sm:$0xff]
        %v1331 = vld [vmem:[%s1329 + $0x8] sm:$0xff]
        %v1332 = vld [vmem:[%s1329 + $0x10] sm:$0xff]
        %v1333 = vld [vmem:[%s1329 + $0x18] sm:$0xff]
        %v1334 = vld [vmem:[%s1329 + $0x20] sm:$0xff]
        %v1335 = vld [vmem:[%s1329 + $0x28] sm:$0xff]
        %v1336 = vld [vmem:[%s1329 + $0x30] sm:$0xff]
        %v1337 = vld [vmem:[%s1329 + $0x38] sm:$0xff]
        %v1338 = vld [vmem:[%s1329 + $0x40] sm:$0xff]
        %v1339 = vld [vmem:[%s1329 + $0x48] sm:$0xff]
        %v1340 = vld [vmem:[%s1329 + $0x50] sm:$0xff]
        %v1341 = vld [vmem:[%s1329 + $0x58] sm:$0xff]
        %v1342 = vld [vmem:[%s1329 + $0x60] sm:$0xff]
        %v1343 = vld [vmem:[%s1329 + $0x68] sm:$0xff]
        %v1344 = vld [vmem:[%s1329 + $0x70] sm:$0xff]
        %v1345 = vld [vmem:[%s1329 + $0x78] sm:$0xff]
        %s1346 = scalar_lea.vmem %s2, 3
        %v1347 = vld [vmem:[%s1346] sm:$0x1]
        %v1349 = vlaneseq
        %v1350 = vshrl.u32 %v1349, 7
        %v1351 = vsub.s32 0, %v1350
        %v1352 = vrot.slane %v1347, %v1351
        %1354 = vmatprep.subr.mxu0 0.0
        %1355 = vmatpush1.msra.mxu0 %v1345
        %1356 = vmatprep.subr.mxu0 0.0
        %1357 = vmatpush1.msra.mxu0 %v1344
        %1358 = vmatprep.subr.mxu0 0.0
        %1359 = vmatpush1.msra.mxu0 %v1343
        %1360 = vmatprep.subr.mxu0 0.0
        %1361 = vmatpush1.msra.mxu0 %v1342
        %1362 = vmatprep.subr.mxu0 0.0
        %1363 = vmatpush1.msra.mxu0 %v1341
        %1364 = vmatprep.subr.mxu0 0.0
        %1365 = vmatpush1.msra.mxu0 %v1340
        %1366 = vmatprep.subr.mxu0 0.0
        %1367 = vmatpush1.msra.mxu0 %v1339
        %1368 = vmatprep.subr.mxu0 0.0
        %1369 = vmatpush1.msra.mxu0 %v1338
        %1370 = vmatprep.subr.mxu0 0.0
        %1371 = vmatpush1.msra.mxu0 %v1337
        %1372 = vmatprep.subr.mxu0 0.0
        %1373 = vmatpush1.msra.mxu0 %v1336
        %1374 = vmatprep.subr.mxu0 0.0
        %1375 = vmatpush1.msra.mxu0 %v1335
        %1376 = vmatprep.subr.mxu0 0.0
        %1377 = vmatpush1.msra.mxu0 %v1334
        %1378 = vmatprep.subr.mxu0 0.0
        %1379 = vmatpush1.msra.mxu0 %v1333
        %1380 = vmatprep.subr.mxu0 0.0
        %1381 = vmatpush1.msra.mxu0 %v1332
        %1382 = vmatprep.subr.mxu0 0.0
        %1383 = vmatpush1.msra.mxu0 %v1331
        %1384 = vmatprep.subr.mxu0 0.0
        %1385 = vmatpush1.msra.mxu0 %v1330
        %1386 = vmatprep.subr.mxu0 0.0
        %1387 = vmatpush2.msra.mxu0 0.0
        %1388 = vmatprep.subr.mxu0 0.0
        %1389 = vmatpush2.msra.mxu0 0.0
        %1390 = vmatprep.subr.mxu0 0.0
        %1391 = vmatpush2.msra.mxu0 0.0
        %1392 = vmatprep.subr.mxu0 0.0
        %1393 = vmatpush2.msra.mxu0 0.0
        %1394 = vmatprep.subr.mxu0 0.0
        %1395 = vmatpush2.msra.mxu0 0.0
        %1396 = vmatprep.subr.mxu0 0.0
        %1397 = vmatpush2.msra.mxu0 0.0
        %1398 = vmatprep.subr.mxu0 0.0
        %1399 = vmatpush2.msra.mxu0 0.0
        %1400 = vmatprep.subr.mxu0 0.0
        %1401 = vmatpush2.msra.mxu0 0.0
        %1402 = vmatprep.subr.mxu0 0.0
        %1403 = vmatpush2.msra.mxu0 0.0
        %1404 = vmatprep.subr.mxu0 0.0
        %1405 = vmatpush2.msra.mxu0 0.0
        %1406 = vmatprep.subr.mxu0 0.0
        %1407 = vmatpush2.msra.mxu0 0.0
        %1408 = vmatprep.subr.mxu0 0.0
        %1409 = vmatpush2.msra.mxu0 0.0
        %1410 = vmatprep.subr.mxu0 0.0
        %1411 = vmatpush2.msra.mxu0 0.0
        %1412 = vmatprep.subr.mxu0 0.0
        %1413 = vmatpush2.msra.mxu0 0.0
        %1414 = vmatprep.subr.mxu0 0.0
        %1415 = vmatpush2.msra.mxu0 0.0
        %1416 = vmatprep.subr.mxu0 0.0
        %1417 = vmatpush2.msra.mxu0 0.0
        %1418 = vmatprep.mubr.f32.mxu0 0.0
        %1419 = vmatmul.mubr.f32.gmra.mxu0 %v1106
        %v1420 = vpop.f32.mrf.mxu0
        %v1421 = vadd.f32 %v1352, %v1420
        %v1422 = vpop.f32.mrf.mxu0
        %1423 = vmatprep.mubr.f32.mxu0 0.0
        %1424 = vmatmul.mubr.f32.gmra.mxu0 %v1111
        %v1425 = vpop.f32.mrf.mxu0
        %v1426 = vadd.f32 %v1352, %v1425
        %v1427 = vpop.f32.mrf.mxu0
        %1428 = vmatprep.mubr.f32.mxu0 0.0
        %1429 = vmatmul.mubr.f32.gmra.mxu0 %v1116
        %v1430 = vpop.f32.mrf.mxu0
        %v1431 = vadd.f32 %v1352, %v1430
        %v1432 = vpop.f32.mrf.mxu0
        %1433 = vmatprep.mubr.f32.mxu0 0.0
        %1434 = vmatmul.mubr.f32.gmra.mxu0 %v1121
        %v1435 = vpop.f32.mrf.mxu0
        %v1436 = vadd.f32 %v1352, %v1435
        %v1437 = vpop.f32.mrf.mxu0
        %1438 = vmatprep.mubr.f32.mxu0 0.0
        %1439 = vmatmul.mubr.f32.gmra.mxu0 %v1126
        %v1440 = vpop.f32.mrf.mxu0
        %v1441 = vadd.f32 %v1352, %v1440
        %v1442 = vpop.f32.mrf.mxu0
        %1443 = vmatprep.mubr.f32.mxu0 0.0
        %1444 = vmatmul.mubr.f32.gmra.mxu0 %v1131
        %v1445 = vpop.f32.mrf.mxu0
        %v1446 = vadd.f32 %v1352, %v1445
        %v1447 = vpop.f32.mrf.mxu0
        %1448 = vmatprep.mubr.f32.mxu0 0.0
        %1449 = vmatmul.mubr.f32.gmra.mxu0 %v1136
        %v1450 = vpop.f32.mrf.mxu0
        %v1451 = vadd.f32 %v1352, %v1450
        %v1452 = vpop.f32.mrf.mxu0
        %1453 = vmatprep.mubr.f32.mxu0 0.0
        %1454 = vmatmul.mubr.f32.gmra.mxu0 %v1141
        %v1455 = vpop.f32.mrf.mxu0
        %v1456 = vadd.f32 %v1352, %v1455
        %v1457 = vpop.f32.mrf.mxu0
        %1458 = vmatprep.mubr.f32.mxu0 0.0
        %1459 = vmatmul.mubr.f32.gmra.mxu0 %v1146
        %v1460 = vpop.f32.mrf.mxu0
        %v1461 = vadd.f32 %v1352, %v1460
        %v1462 = vpop.f32.mrf.mxu0
        %1463 = vmatprep.mubr.f32.mxu0 0.0
        %1464 = vmatmul.mubr.f32.gmra.mxu0 %v1151
        %v1465 = vpop.f32.mrf.mxu0
        %v1466 = vadd.f32 %v1352, %v1465
        %v1467 = vpop.f32.mrf.mxu0
        %1468 = vmatprep.mubr.f32.mxu0 0.0
        %1469 = vmatmul.mubr.f32.gmra.mxu0 %v1156
        %v1470 = vpop.f32.mrf.mxu0
        %v1471 = vadd.f32 %v1352, %v1470
        %v1472 = vpop.f32.mrf.mxu0
        %1473 = vmatprep.mubr.f32.mxu0 0.0
        %1474 = vmatmul.mubr.f32.gmra.mxu0 %v1161
        %v1475 = vpop.f32.mrf.mxu0
        %v1476 = vadd.f32 %v1352, %v1475
        %v1477 = vpop.f32.mrf.mxu0
        %1478 = vmatprep.mubr.f32.mxu0 0.0
        %1479 = vmatmul.mubr.f32.gmra.mxu0 %v1166
        %v1480 = vpop.f32.mrf.mxu0
        %v1481 = vadd.f32 %v1352, %v1480
        %v1482 = vpop.f32.mrf.mxu0
        %1483 = vmatprep.mubr.f32.mxu0 0.0
        %1484 = vmatmul.mubr.f32.gmra.mxu0 %v1171
        %v1485 = vpop.f32.mrf.mxu0
        %v1486 = vadd.f32 %v1352, %v1485
        %v1487 = vpop.f32.mrf.mxu0
        %1488 = vmatprep.mubr.f32.mxu0 0.0
        %1489 = vmatmul.mubr.f32.gmra.mxu0 %v1176
        %v1490 = vpop.f32.mrf.mxu0
        %v1491 = vadd.f32 %v1352, %v1490
        %v1492 = vpop.f32.mrf.mxu0
        %1493 = vmatprep.mubr.f32.mxu0 0.0
        %1494 = vmatmul.mubr.f32.gmra.mxu0 %v1181
        %v1495 = vpop.f32.mrf.mxu0
        %v1496 = vadd.f32 %v1352, %v1495
        %v1497 = vpop.f32.mrf.mxu0
        %1498 = vdwg.mxu0
        %v1499 = vmax.f32 %v1421, 0.0
        %v1500 = vmax.f32 %v1426, 0.0
        %v1501 = vmax.f32 %v1431, 0.0
        %v1502 = vmax.f32 %v1436, 0.0
        %v1503 = vmax.f32 %v1441, 0.0
        %v1504 = vmax.f32 %v1446, 0.0
        %v1505 = vmax.f32 %v1451, 0.0
        %v1506 = vmax.f32 %v1456, 0.0
        %v1507 = vmax.f32 %v1461, 0.0
        %v1508 = vmax.f32 %v1466, 0.0
        %v1509 = vmax.f32 %v1471, 0.0
        %v1510 = vmax.f32 %v1476, 0.0
        %v1511 = vmax.f32 %v1481, 0.0
        %v1512 = vmax.f32 %v1486, 0.0
        %v1513 = vmax.f32 %v1491, 0.0
        %v1514 = vmax.f32 %v1496, 0.0
        %1515 = vmatprep.subr.mxu0 0.0
        %1516 = vmatpush1.msra.mxu0 %v1345
        %1517 = vmatprep.subr.mxu0 0.0
        %1518 = vmatpush1.msra.mxu0 %v1344
        %1519 = vmatprep.subr.mxu0 0.0
        %1520 = vmatpush1.msra.mxu0 %v1343
        %1521 = vmatprep.subr.mxu0 0.0
        %1522 = vmatpush1.msra.mxu0 %v1342
        %1523 = vmatprep.subr.mxu0 0.0
        %1524 = vmatpush1.msra.mxu0 %v1341
        %1525 = vmatprep.subr.mxu0 0.0
        %1526 = vmatpush1.msra.mxu0 %v1340
        %1527 = vmatprep.subr.mxu0 0.0
        %1528 = vmatpush1.msra.mxu0 %v1339
        %1529 = vmatprep.subr.mxu0 0.0
        %1530 = vmatpush1.msra.mxu0 %v1338
        %1531 = vmatprep.subr.mxu0 0.0
        %1532 = vmatpush1.msra.mxu0 %v1337
        %1533 = vmatprep.subr.mxu0 0.0
        %1534 = vmatpush1.msra.mxu0 %v1336
        %1535 = vmatprep.subr.mxu0 0.0
        %1536 = vmatpush1.msra.mxu0 %v1335
        %1537 = vmatprep.subr.mxu0 0.0
        %1538 = vmatpush1.msra.mxu0 %v1334
        %1539 = vmatprep.subr.mxu0 0.0
        %1540 = vmatpush1.msra.mxu0 %v1333
        %1541 = vmatprep.subr.mxu0 0.0
        %1542 = vmatpush1.msra.mxu0 %v1332
        %1543 = vmatprep.subr.mxu0 0.0
        %1544 = vmatpush1.msra.mxu0 %v1331
        %1545 = vmatprep.subr.mxu0 0.0
        %1546 = vmatpush1.msra.mxu0 %v1330
        %1547 = vmatprep.subr.mxu0 0.0
        %1548 = vmatpush2.msra.mxu0 0.0
        %1549 = vmatprep.subr.mxu0 0.0
        %1550 = vmatpush2.msra.mxu0 0.0
        %1551 = vmatprep.subr.mxu0 0.0
        %1552 = vmatpush2.msra.mxu0 0.0
        %1553 = vmatprep.subr.mxu0 0.0
        %1554 = vmatpush2.msra.mxu0 0.0
        %1555 = vmatprep.subr.mxu0 0.0
        %1556 = vmatpush2.msra.mxu0 0.0
        %1557 = vmatprep.subr.mxu0 0.0
        %1558 = vmatpush2.msra.mxu0 0.0
        %1559 = vmatprep.subr.mxu0 0.0
        %1560 = vmatpush2.msra.mxu0 0.0
        %1561 = vmatprep.subr.mxu0 0.0
        %1562 = vmatpush2.msra.mxu0 0.0
        %1563 = vmatprep.subr.mxu0 0.0
        %1564 = vmatpush2.msra.mxu0 0.0
        %1565 = vmatprep.subr.mxu0 0.0
        %1566 = vmatpush2.msra.mxu0 0.0
        %1567 = vmatprep.subr.mxu0 0.0
        %1568 = vmatpush2.msra.mxu0 0.0
        %1569 = vmatprep.subr.mxu0 0.0
        %1570 = vmatpush2.msra.mxu0 0.0
        %1571 = vmatprep.subr.mxu0 0.0
        %1572 = vmatpush2.msra.mxu0 0.0
        %1573 = vmatprep.subr.mxu0 0.0
        %1574 = vmatpush2.msra.mxu0 0.0
        %1575 = vmatprep.subr.mxu0 0.0
        %1576 = vmatpush2.msra.mxu0 0.0
        %1577 = vmatprep.subr.mxu0 0.0
        %1578 = vmatpush2.msra.mxu0 0.0
        %1579 = vmatprep.mubr.f32.mxu0 0.0
        %1580 = vmatmul.mubr.f32.gmra.mxu0 %v1251
        %v1581 = vpop.f32.mrf.mxu0
        %v1582 = vadd.f32 %v1352, %v1581
        %v1583 = vpop.f32.mrf.mxu0
        %1584 = vmatprep.mubr.f32.mxu0 0.0
        %1585 = vmatmul.mubr.f32.gmra.mxu0 %v1256
        %v1586 = vpop.f32.mrf.mxu0
        %v1587 = vadd.f32 %v1352, %v1586
        %v1588 = vpop.f32.mrf.mxu0
        %1589 = vmatprep.mubr.f32.mxu0 0.0
        %1590 = vmatmul.mubr.f32.gmra.mxu0 %v1261
        %v1591 = vpop.f32.mrf.mxu0
        %v1592 = vadd.f32 %v1352, %v1591
        %v1593 = vpop.f32.mrf.mxu0
        %1594 = vmatprep.mubr.f32.mxu0 0.0
        %1595 = vmatmul.mubr.f32.gmra.mxu0 %v1266
        %v1596 = vpop.f32.mrf.mxu0
        %v1597 = vadd.f32 %v1352, %v1596
        %v1598 = vpop.f32.mrf.mxu0
        %1599 = vmatprep.mubr.f32.mxu0 0.0
        %1600 = vmatmul.mubr.f32.gmra.mxu0 %v1271
        %v1601 = vpop.f32.mrf.mxu0
        %v1602 = vadd.f32 %v1352, %v1601
        %v1603 = vpop.f32.mrf.mxu0
        %1604 = vmatprep.mubr.f32.mxu0 0.0
        %1605 = vmatmul.mubr.f32.gmra.mxu0 %v1276
        %v1606 = vpop.f32.mrf.mxu0
        %v1607 = vadd.f32 %v1352, %v1606
        %v1608 = vpop.f32.mrf.mxu0
        %1609 = vmatprep.mubr.f32.mxu0 0.0
        %1610 = vmatmul.mubr.f32.gmra.mxu0 %v1281
        %v1611 = vpop.f32.mrf.mxu0
        %v1612 = vadd.f32 %v1352, %v1611
        %v1613 = vpop.f32.mrf.mxu0
        %1614 = vmatprep.mubr.f32.mxu0 0.0
        %1615 = vmatmul.mubr.f32.gmra.mxu0 %v1286
        %v1616 = vpop.f32.mrf.mxu0
        %v1617 = vadd.f32 %v1352, %v1616
        %v1618 = vpop.f32.mrf.mxu0
        %1619 = vmatprep.mubr.f32.mxu0 0.0
        %1620 = vmatmul.mubr.f32.gmra.mxu0 %v1291
        %v1621 = vpop.f32.mrf.mxu0
        %v1622 = vadd.f32 %v1352, %v1621
        %v1623 = vpop.f32.mrf.mxu0
        %1624 = vmatprep.mubr.f32.mxu0 0.0
        %1625 = vmatmul.mubr.f32.gmra.mxu0 %v1296
        %v1626 = vpop.f32.mrf.mxu0
        %v1627 = vadd.f32 %v1352, %v1626
        %v1628 = vpop.f32.mrf.mxu0
        %1629 = vmatprep.mubr.f32.mxu0 0.0
        %1630 = vmatmul.mubr.f32.gmra.mxu0 %v1301
        %v1631 = vpop.f32.mrf.mxu0
        %v1632 = vadd.f32 %v1352, %v1631
        %v1633 = vpop.f32.mrf.mxu0
        %1634 = vmatprep.mubr.f32.mxu0 0.0
        %1635 = vmatmul.mubr.f32.gmra.mxu0 %v1306
        %v1636 = vpop.f32.mrf.mxu0
        %v1637 = vadd.f32 %v1352, %v1636
        %v1638 = vpop.f32.mrf.mxu0
        %1639 = vmatprep.mubr.f32.mxu0 0.0
        %1640 = vmatmul.mubr.f32.gmra.mxu0 %v1311
        %v1641 = vpop.f32.mrf.mxu0
        %v1642 = vadd.f32 %v1352, %v1641
        %v1643 = vpop.f32.mrf.mxu0
        %1644 = vmatprep.mubr.f32.mxu0 0.0
        %1645 = vmatmul.mubr.f32.gmra.mxu0 %v1316
        %v1646 = vpop.f32.mrf.mxu0
        %v1647 = vadd.f32 %v1352, %v1646
        %v1648 = vpop.f32.mrf.mxu0
        %1649 = vmatprep.mubr.f32.mxu0 0.0
        %1650 = vmatmul.mubr.f32.gmra.mxu0 %v1321
        %v1651 = vpop.f32.mrf.mxu0
        %v1652 = vadd.f32 %v1352, %v1651
        %v1653 = vpop.f32.mrf.mxu0
        %1654 = vmatprep.mubr.f32.mxu0 0.0
        %1655 = vmatmul.mubr.f32.gmra.mxu0 %v1326
        %v1656 = vpop.f32.mrf.mxu0
        %v1657 = vadd.f32 %v1352, %v1656
        %v1658 = vpop.f32.mrf.mxu0
        %1659 = vdwg.mxu0
        %v1660 = vmax.f32 %v1582, 0.0
        %v1661 = vmax.f32 %v1587, 0.0
        %v1662 = vmax.f32 %v1592, 0.0
        %v1663 = vmax.f32 %v1597, 0.0
        %v1664 = vmax.f32 %v1602, 0.0
        %v1665 = vmax.f32 %v1607, 0.0
        %v1666 = vmax.f32 %v1612, 0.0
        %v1667 = vmax.f32 %v1617, 0.0
        %v1668 = vmax.f32 %v1622, 0.0
        %v1669 = vmax.f32 %v1627, 0.0
        %v1670 = vmax.f32 %v1632, 0.0
        %v1671 = vmax.f32 %v1637, 0.0
        %v1672 = vmax.f32 %v1642, 0.0
        %v1673 = vmax.f32 %v1647, 0.0
        %v1674 = vmax.f32 %v1652, 0.0
        %v1675 = vmax.f32 %v1657, 0.0
        %s1676 = scalar_lea.vmem [#allocation2], 512
        %v1677 = vld [vmem:[%s1676] sm:$0xff]
        %v1678 = vld [vmem:[%s1676 + $0x8] sm:$0xff]
        %v1679 = vld [vmem:[%s1676 + $0x10] sm:$0xff]
        %v1680 = vld [vmem:[%s1676 + $0x18] sm:$0xff]
        %v1681 = vld [vmem:[%s1676 + $0x20] sm:$0xff]
        %v1682 = vld [vmem:[%s1676 + $0x28] sm:$0xff]
        %v1683 = vld [vmem:[%s1676 + $0x30] sm:$0xff]
        %v1684 = vld [vmem:[%s1676 + $0x38] sm:$0xff]
        %v1685 = vld [vmem:[%s1676 + $0x40] sm:$0xff]
        %v1686 = vld [vmem:[%s1676 + $0x48] sm:$0xff]
        %v1687 = vld [vmem:[%s1676 + $0x50] sm:$0xff]
        %v1688 = vld [vmem:[%s1676 + $0x58] sm:$0xff]
        %v1689 = vld [vmem:[%s1676 + $0x60] sm:$0xff]
        %v1690 = vld [vmem:[%s1676 + $0x68] sm:$0xff]
        %v1691 = vld [vmem:[%s1676 + $0x70] sm:$0xff]
        %v1692 = vld [vmem:[%s1676 + $0x78] sm:$0xff]
        %s1693 = scalar_lea.vmem %s2, 4
        %v1694 = vld [vmem:[%s1693] sm:$0x1]
        %v1696 = vlaneseq
        %v1697 = vshrl.u32 %v1696, 7
        %v1698 = vsub.s32 0, %v1697
        %v1699 = vrot.slane %v1694, %v1698
        %1701 = vmatprep.subr.mxu0 0.0
        %1702 = vmatpush1.msra.mxu0 %v1692
        %1703 = vmatprep.subr.mxu0 0.0
        %1704 = vmatpush1.msra.mxu0 %v1691
        %1705 = vmatprep.subr.mxu0 0.0
        %1706 = vmatpush1.msra.mxu0 %v1690
        %1707 = vmatprep.subr.mxu0 0.0
        %1708 = vmatpush1.msra.mxu0 %v1689
        %1709 = vmatprep.subr.mxu0 0.0
        %1710 = vmatpush1.msra.mxu0 %v1688
        %1711 = vmatprep.subr.mxu0 0.0
        %1712 = vmatpush1.msra.mxu0 %v1687
        %1713 = vmatprep.subr.mxu0 0.0
        %1714 = vmatpush1.msra.mxu0 %v1686
        %1715 = vmatprep.subr.mxu0 0.0
        %1716 = vmatpush1.msra.mxu0 %v1685
        %1717 = vmatprep.subr.mxu0 0.0
        %1718 = vmatpush1.msra.mxu0 %v1684
        %1719 = vmatprep.subr.mxu0 0.0
        %1720 = vmatpush1.msra.mxu0 %v1683
        %1721 = vmatprep.subr.mxu0 0.0
        %1722 = vmatpush1.msra.mxu0 %v1682
        %1723 = vmatprep.subr.mxu0 0.0
        %1724 = vmatpush1.msra.mxu0 %v1681
        %1725 = vmatprep.subr.mxu0 0.0
        %1726 = vmatpush1.msra.mxu0 %v1680
        %1727 = vmatprep.subr.mxu0 0.0
        %1728 = vmatpush1.msra.mxu0 %v1679
        %1729 = vmatprep.subr.mxu0 0.0
        %1730 = vmatpush1.msra.mxu0 %v1678
        %1731 = vmatprep.subr.mxu0 0.0
        %1732 = vmatpush1.msra.mxu0 %v1677
        %1733 = vmatprep.subr.mxu0 0.0
        %1734 = vmatpush2.msra.mxu0 0.0
        %1735 = vmatprep.subr.mxu0 0.0
        %1736 = vmatpush2.msra.mxu0 0.0
        %1737 = vmatprep.subr.mxu0 0.0
        %1738 = vmatpush2.msra.mxu0 0.0
        %1739 = vmatprep.subr.mxu0 0.0
        %1740 = vmatpush2.msra.mxu0 0.0
        %1741 = vmatprep.subr.mxu0 0.0
        %1742 = vmatpush2.msra.mxu0 0.0
        %1743 = vmatprep.subr.mxu0 0.0
        %1744 = vmatpush2.msra.mxu0 0.0
        %1745 = vmatprep.subr.mxu0 0.0
        %1746 = vmatpush2.msra.mxu0 0.0
        %1747 = vmatprep.subr.mxu0 0.0
        %1748 = vmatpush2.msra.mxu0 0.0
        %1749 = vmatprep.subr.mxu0 0.0
        %1750 = vmatpush2.msra.mxu0 0.0
        %1751 = vmatprep.subr.mxu0 0.0
        %1752 = vmatpush2.msra.mxu0 0.0
        %1753 = vmatprep.subr.mxu0 0.0
        %1754 = vmatpush2.msra.mxu0 0.0
        %1755 = vmatprep.subr.mxu0 0.0
        %1756 = vmatpush2.msra.mxu0 0.0
        %1757 = vmatprep.subr.mxu0 0.0
        %1758 = vmatpush2.msra.mxu0 0.0
        %1759 = vmatprep.subr.mxu0 0.0
        %1760 = vmatpush2.msra.mxu0 0.0
        %1761 = vmatprep.subr.mxu0 0.0
        %1762 = vmatpush2.msra.mxu0 0.0
        %1763 = vmatprep.subr.mxu0 0.0
        %1764 = vmatpush2.msra.mxu0 0.0
        %1765 = vmatprep.mubr.f32.mxu0 0.0
        %1766 = vmatmul.mubr.f32.gmra.mxu0 %v1499
        %v1767 = vpop.f32.mrf.mxu0
        %v1768 = vadd.f32 %v1699, %v1767
        %v1769 = vpop.f32.mrf.mxu0
        %1770 = vmatprep.mubr.f32.mxu0 0.0
        %1771 = vmatmul.mubr.f32.gmra.mxu0 %v1500
        %v1772 = vpop.f32.mrf.mxu0
        %v1773 = vadd.f32 %v1699, %v1772
        %v1774 = vpop.f32.mrf.mxu0
        %1775 = vmatprep.mubr.f32.mxu0 0.0
        %1776 = vmatmul.mubr.f32.gmra.mxu0 %v1501
        %v1777 = vpop.f32.mrf.mxu0
        %v1778 = vadd.f32 %v1699, %v1777
        %v1779 = vpop.f32.mrf.mxu0
        %1780 = vmatprep.mubr.f32.mxu0 0.0
        %1781 = vmatmul.mubr.f32.gmra.mxu0 %v1502
        %v1782 = vpop.f32.mrf.mxu0
        %v1783 = vadd.f32 %v1699, %v1782
        %v1784 = vpop.f32.mrf.mxu0
        %1785 = vmatprep.mubr.f32.mxu0 0.0
        %1786 = vmatmul.mubr.f32.gmra.mxu0 %v1503
        %v1787 = vpop.f32.mrf.mxu0
        %v1788 = vadd.f32 %v1699, %v1787
        %v1789 = vpop.f32.mrf.mxu0
        %1790 = vmatprep.mubr.f32.mxu0 0.0
        %1791 = vmatmul.mubr.f32.gmra.mxu0 %v1504
        %v1792 = vpop.f32.mrf.mxu0
        %v1793 = vadd.f32 %v1699, %v1792
        %v1794 = vpop.f32.mrf.mxu0
        %1795 = vmatprep.mubr.f32.mxu0 0.0
        %1796 = vmatmul.mubr.f32.gmra.mxu0 %v1505
        %v1797 = vpop.f32.mrf.mxu0
        %v1798 = vadd.f32 %v1699, %v1797
        %v1799 = vpop.f32.mrf.mxu0
        %1800 = vmatprep.mubr.f32.mxu0 0.0
        %1801 = vmatmul.mubr.f32.gmra.mxu0 %v1506
        %v1802 = vpop.f32.mrf.mxu0
        %v1803 = vadd.f32 %v1699, %v1802
        %v1804 = vpop.f32.mrf.mxu0
        %1805 = vmatprep.mubr.f32.mxu0 0.0
        %1806 = vmatmul.mubr.f32.gmra.mxu0 %v1507
        %v1807 = vpop.f32.mrf.mxu0
        %v1808 = vadd.f32 %v1699, %v1807
        %v1809 = vpop.f32.mrf.mxu0
        %1810 = vmatprep.mubr.f32.mxu0 0.0
        %1811 = vmatmul.mubr.f32.gmra.mxu0 %v1508
        %v1812 = vpop.f32.mrf.mxu0
        %v1813 = vadd.f32 %v1699, %v1812
        %v1814 = vpop.f32.mrf.mxu0
        %1815 = vmatprep.mubr.f32.mxu0 0.0
        %1816 = vmatmul.mubr.f32.gmra.mxu0 %v1509
        %v1817 = vpop.f32.mrf.mxu0
        %v1818 = vadd.f32 %v1699, %v1817
        %v1819 = vpop.f32.mrf.mxu0
        %1820 = vmatprep.mubr.f32.mxu0 0.0
        %1821 = vmatmul.mubr.f32.gmra.mxu0 %v1510
        %v1822 = vpop.f32.mrf.mxu0
        %v1823 = vadd.f32 %v1699, %v1822
        %v1824 = vpop.f32.mrf.mxu0
        %1825 = vmatprep.mubr.f32.mxu0 0.0
        %1826 = vmatmul.mubr.f32.gmra.mxu0 %v1511
        %v1827 = vpop.f32.mrf.mxu0
        %v1828 = vadd.f32 %v1699, %v1827
        %v1829 = vpop.f32.mrf.mxu0
        %1830 = vmatprep.mubr.f32.mxu0 0.0
        %1831 = vmatmul.mubr.f32.gmra.mxu0 %v1512
        %v1832 = vpop.f32.mrf.mxu0
        %v1833 = vadd.f32 %v1699, %v1832
        %v1834 = vpop.f32.mrf.mxu0
        %1835 = vmatprep.mubr.f32.mxu0 0.0
        %1836 = vmatmul.mubr.f32.gmra.mxu0 %v1513
        %v1837 = vpop.f32.mrf.mxu0
        %v1838 = vadd.f32 %v1699, %v1837
        %v1839 = vpop.f32.mrf.mxu0
        %1840 = vmatprep.mubr.f32.mxu0 0.0
        %1841 = vmatmul.mubr.f32.gmra.mxu0 %v1514
        %v1842 = vpop.f32.mrf.mxu0
        %v1843 = vadd.f32 %v1699, %v1842
        %v1844 = vpop.f32.mrf.mxu0
        %1845 = vdwg.mxu0
        %v1846 = vmax.f32 %v1768, 0.0
        %v1847 = vmax.f32 %v1773, 0.0
        %v1848 = vmax.f32 %v1778, 0.0
        %v1849 = vmax.f32 %v1783, 0.0
        %v1850 = vmax.f32 %v1788, 0.0
        %v1851 = vmax.f32 %v1793, 0.0
        %v1852 = vmax.f32 %v1798, 0.0
        %v1853 = vmax.f32 %v1803, 0.0
        %v1854 = vmax.f32 %v1808, 0.0
        %v1855 = vmax.f32 %v1813, 0.0
        %v1856 = vmax.f32 %v1818, 0.0
        %v1857 = vmax.f32 %v1823, 0.0
        %v1858 = vmax.f32 %v1828, 0.0
        %v1859 = vmax.f32 %v1833, 0.0
        %v1860 = vmax.f32 %v1838, 0.0
        %v1861 = vmax.f32 %v1843, 0.0
        %1862 = vmatprep.subr.mxu0 0.0
        %1863 = vmatpush1.msra.mxu0 %v1692
        %1864 = vmatprep.subr.mxu0 0.0
        %1865 = vmatpush1.msra.mxu0 %v1691
        %1866 = vmatprep.subr.mxu0 0.0
        %1867 = vmatpush1.msra.mxu0 %v1690
        %1868 = vmatprep.subr.mxu0 0.0
        %1869 = vmatpush1.msra.mxu0 %v1689
        %1870 = vmatprep.subr.mxu0 0.0
        %1871 = vmatpush1.msra.mxu0 %v1688
        %1872 = vmatprep.subr.mxu0 0.0
        %1873 = vmatpush1.msra.mxu0 %v1687
        %1874 = vmatprep.subr.mxu0 0.0
        %1875 = vmatpush1.msra.mxu0 %v1686
        %1876 = vmatprep.subr.mxu0 0.0
        %1877 = vmatpush1.msra.mxu0 %v1685
        %1878 = vmatprep.subr.mxu0 0.0
        %1879 = vmatpush1.msra.mxu0 %v1684
        %1880 = vmatprep.subr.mxu0 0.0
        %1881 = vmatpush1.msra.mxu0 %v1683
        %1882 = vmatprep.subr.mxu0 0.0
        %1883 = vmatpush1.msra.mxu0 %v1682
        %1884 = vmatprep.subr.mxu0 0.0
        %1885 = vmatpush1.msra.mxu0 %v1681
        %1886 = vmatprep.subr.mxu0 0.0
        %1887 = vmatpush1.msra.mxu0 %v1680
        %1888 = vmatprep.subr.mxu0 0.0
        %1889 = vmatpush1.msra.mxu0 %v1679
        %1890 = vmatprep.subr.mxu0 0.0
        %1891 = vmatpush1.msra.mxu0 %v1678
        %1892 = vmatprep.subr.mxu0 0.0
        %1893 = vmatpush1.msra.mxu0 %v1677
        %1894 = vmatprep.subr.mxu0 0.0
        %1895 = vmatpush2.msra.mxu0 0.0
        %1896 = vmatprep.subr.mxu0 0.0
        %1897 = vmatpush2.msra.mxu0 0.0
        %1898 = vmatprep.subr.mxu0 0.0
        %1899 = vmatpush2.msra.mxu0 0.0
        %1900 = vmatprep.subr.mxu0 0.0
        %1901 = vmatpush2.msra.mxu0 0.0
        %1902 = vmatprep.subr.mxu0 0.0
        %1903 = vmatpush2.msra.mxu0 0.0
        %1904 = vmatprep.subr.mxu0 0.0
        %1905 = vmatpush2.msra.mxu0 0.0
        %1906 = vmatprep.subr.mxu0 0.0
        %1907 = vmatpush2.msra.mxu0 0.0
        %1908 = vmatprep.subr.mxu0 0.0
        %1909 = vmatpush2.msra.mxu0 0.0
        %1910 = vmatprep.subr.mxu0 0.0
        %1911 = vmatpush2.msra.mxu0 0.0
        %1912 = vmatprep.subr.mxu0 0.0
        %1913 = vmatpush2.msra.mxu0 0.0
        %1914 = vmatprep.subr.mxu0 0.0
        %1915 = vmatpush2.msra.mxu0 0.0
        %1916 = vmatprep.subr.mxu0 0.0
        %1917 = vmatpush2.msra.mxu0 0.0
        %1918 = vmatprep.subr.mxu0 0.0
        %1919 = vmatpush2.msra.mxu0 0.0
        %1920 = vmatprep.subr.mxu0 0.0
        %1921 = vmatpush2.msra.mxu0 0.0
        %1922 = vmatprep.subr.mxu0 0.0
        %1923 = vmatpush2.msra.mxu0 0.0
        %1924 = vmatprep.subr.mxu0 0.0
        %1925 = vmatpush2.msra.mxu0 0.0
        %1926 = vmatprep.mubr.f32.mxu0 0.0
        %1927 = vmatmul.mubr.f32.gmra.mxu0 %v1660
        %v1928 = vpop.f32.mrf.mxu0
        %v1929 = vadd.f32 %v1699, %v1928
        %v1930 = vpop.f32.mrf.mxu0
        %1931 = vmatprep.mubr.f32.mxu0 0.0
        %1932 = vmatmul.mubr.f32.gmra.mxu0 %v1661
        %v1933 = vpop.f32.mrf.mxu0
        %v1934 = vadd.f32 %v1699, %v1933
        %v1935 = vpop.f32.mrf.mxu0
        %1936 = vmatprep.mubr.f32.mxu0 0.0
        %1937 = vmatmul.mubr.f32.gmra.mxu0 %v1662
        %v1938 = vpop.f32.mrf.mxu0
        %v1939 = vadd.f32 %v1699, %v1938
        %v1940 = vpop.f32.mrf.mxu0
        %1941 = vmatprep.mubr.f32.mxu0 0.0
        %1942 = vmatmul.mubr.f32.gmra.mxu0 %v1663
        %v1943 = vpop.f32.mrf.mxu0
        %v1944 = vadd.f32 %v1699, %v1943
        %v1945 = vpop.f32.mrf.mxu0
        %1946 = vmatprep.mubr.f32.mxu0 0.0
        %1947 = vmatmul.mubr.f32.gmra.mxu0 %v1664
        %v1948 = vpop.f32.mrf.mxu0
        %v1949 = vadd.f32 %v1699, %v1948
        %v1950 = vpop.f32.mrf.mxu0
        %1951 = vmatprep.mubr.f32.mxu0 0.0
        %1952 = vmatmul.mubr.f32.gmra.mxu0 %v1665
        %v1953 = vpop.f32.mrf.mxu0
        %v1954 = vadd.f32 %v1699, %v1953
        %v1955 = vpop.f32.mrf.mxu0
        %1956 = vmatprep.mubr.f32.mxu0 0.0
        %1957 = vmatmul.mubr.f32.gmra.mxu0 %v1666
        %v1958 = vpop.f32.mrf.mxu0
        %v1959 = vadd.f32 %v1699, %v1958
        %v1960 = vpop.f32.mrf.mxu0
        %1961 = vmatprep.mubr.f32.mxu0 0.0
        %1962 = vmatmul.mubr.f32.gmra.mxu0 %v1667
        %v1963 = vpop.f32.mrf.mxu0
        %v1964 = vadd.f32 %v1699, %v1963
        %v1965 = vpop.f32.mrf.mxu0
        %1966 = vmatprep.mubr.f32.mxu0 0.0
        %1967 = vmatmul.mubr.f32.gmra.mxu0 %v1668
        %v1968 = vpop.f32.mrf.mxu0
        %v1969 = vadd.f32 %v1699, %v1968
        %v1970 = vpop.f32.mrf.mxu0
        %1971 = vmatprep.mubr.f32.mxu0 0.0
        %1972 = vmatmul.mubr.f32.gmra.mxu0 %v1669
        %v1973 = vpop.f32.mrf.mxu0
        %v1974 = vadd.f32 %v1699, %v1973
        %v1975 = vpop.f32.mrf.mxu0
        %1976 = vmatprep.mubr.f32.mxu0 0.0
        %1977 = vmatmul.mubr.f32.gmra.mxu0 %v1670
        %v1978 = vpop.f32.mrf.mxu0
        %v1979 = vadd.f32 %v1699, %v1978
        %v1980 = vpop.f32.mrf.mxu0
        %1981 = vmatprep.mubr.f32.mxu0 0.0
        %1982 = vmatmul.mubr.f32.gmra.mxu0 %v1671
        %v1983 = vpop.f32.mrf.mxu0
        %v1984 = vadd.f32 %v1699, %v1983
        %v1985 = vpop.f32.mrf.mxu0
        %1986 = vmatprep.mubr.f32.mxu0 0.0
        %1987 = vmatmul.mubr.f32.gmra.mxu0 %v1672
        %v1988 = vpop.f32.mrf.mxu0
        %v1989 = vadd.f32 %v1699, %v1988
        %v1990 = vpop.f32.mrf.mxu0
        %1991 = vmatprep.mubr.f32.mxu0 0.0
        %1992 = vmatmul.mubr.f32.gmra.mxu0 %v1673
        %v1993 = vpop.f32.mrf.mxu0
        %v1994 = vadd.f32 %v1699, %v1993
        %v1995 = vpop.f32.mrf.mxu0
        %1996 = vmatprep.mubr.f32.mxu0 0.0
        %1997 = vmatmul.mubr.f32.gmra.mxu0 %v1674
        %v1998 = vpop.f32.mrf.mxu0
        %v1999 = vadd.f32 %v1699, %v1998
        %v2000 = vpop.f32.mrf.mxu0
        %2001 = vmatprep.mubr.f32.mxu0 0.0
        %2002 = vmatmul.mubr.f32.gmra.mxu0 %v1675
        %v2003 = vpop.f32.mrf.mxu0
        %v2004 = vadd.f32 %v1699, %v2003
        %v2005 = vpop.f32.mrf.mxu0
        %2006 = vdwg.mxu0
        %v2007 = vmax.f32 %v1929, 0.0
        %v2008 = vmax.f32 %v1934, 0.0
        %v2009 = vmax.f32 %v1939, 0.0
        %v2010 = vmax.f32 %v1944, 0.0
        %v2011 = vmax.f32 %v1949, 0.0
        %v2012 = vmax.f32 %v1954, 0.0
        %v2013 = vmax.f32 %v1959, 0.0
        %v2014 = vmax.f32 %v1964, 0.0
        %v2015 = vmax.f32 %v1969, 0.0
        %v2016 = vmax.f32 %v1974, 0.0
        %v2017 = vmax.f32 %v1979, 0.0
        %v2018 = vmax.f32 %v1984, 0.0
        %v2019 = vmax.f32 %v1989, 0.0
        %v2020 = vmax.f32 %v1994, 0.0
        %v2021 = vmax.f32 %v1999, 0.0
        %v2022 = vmax.f32 %v2004, 0.0
        %v2024 = vlaneseq
        %v2025 = vshrl.u32 %v2024, 7
        %v2026 = vsub.s32 0, %v2025
        %v2027 = vrot.slane %v209, %v2026
        %2029 = vmatprep.subr.mxu0 0.0
        %2030 = vmatpush1.msra.mxu0 %v207
        %2031 = vmatprep.subr.mxu0 0.0
        %2032 = vmatpush1.msra.mxu0 %v206
        %2033 = vmatprep.subr.mxu0 0.0
        %2034 = vmatpush1.msra.mxu0 %v205
        %2035 = vmatprep.subr.mxu0 0.0
        %2036 = vmatpush1.msra.mxu0 %v204
        %2037 = vmatprep.subr.mxu0 0.0
        %2038 = vmatpush1.msra.mxu0 %v203
        %2039 = vmatprep.subr.mxu0 0.0
        %2040 = vmatpush1.msra.mxu0 %v202
        %2041 = vmatprep.subr.mxu0 0.0
        %2042 = vmatpush1.msra.mxu0 %v201
        %2043 = vmatprep.subr.mxu0 0.0
        %2044 = vmatpush1.msra.mxu0 %v200
        %2045 = vmatprep.subr.mxu0 0.0
        %2046 = vmatpush1.msra.mxu0 %v199
        %2047 = vmatprep.subr.mxu0 0.0
        %2048 = vmatpush1.msra.mxu0 %v198
        %2049 = vmatprep.subr.mxu0 0.0
        %2050 = vmatpush1.msra.mxu0 %v197
        %2051 = vmatprep.subr.mxu0 0.0
        %2052 = vmatpush1.msra.mxu0 %v196
        %2053 = vmatprep.subr.mxu0 0.0
        %2054 = vmatpush1.msra.mxu0 %v195
        %2055 = vmatprep.subr.mxu0 0.0
        %2056 = vmatpush1.msra.mxu0 %v194
        %2057 = vmatprep.subr.mxu0 0.0
        %2058 = vmatpush1.msra.mxu0 %v193
        %2059 = vmatprep.subr.mxu0 0.0
        %2060 = vmatpush1.msra.mxu0 %v192
        %2061 = vmatprep.subr.mxu0 0.0
        %2062 = vmatpush2.msra.mxu0 0.0
        %2063 = vmatprep.subr.mxu0 0.0
        %2064 = vmatpush2.msra.mxu0 0.0
        %2065 = vmatprep.subr.mxu0 0.0
        %2066 = vmatpush2.msra.mxu0 0.0
        %2067 = vmatprep.subr.mxu0 0.0
        %2068 = vmatpush2.msra.mxu0 0.0
        %2069 = vmatprep.subr.mxu0 0.0
        %2070 = vmatpush2.msra.mxu0 0.0
        %2071 = vmatprep.subr.mxu0 0.0
        %2072 = vmatpush2.msra.mxu0 0.0
        %2073 = vmatprep.subr.mxu0 0.0
        %2074 = vmatpush2.msra.mxu0 0.0
        %2075 = vmatprep.subr.mxu0 0.0
        %2076 = vmatpush2.msra.mxu0 0.0
        %2077 = vmatprep.subr.mxu0 0.0
        %2078 = vmatpush2.msra.mxu0 0.0
        %2079 = vmatprep.subr.mxu0 0.0
        %2080 = vmatpush2.msra.mxu0 0.0
        %2081 = vmatprep.subr.mxu0 0.0
        %2082 = vmatpush2.msra.mxu0 0.0
        %2083 = vmatprep.subr.mxu0 0.0
        %2084 = vmatpush2.msra.mxu0 0.0
        %2085 = vmatprep.subr.mxu0 0.0
        %2086 = vmatpush2.msra.mxu0 0.0
        %2087 = vmatprep.subr.mxu0 0.0
        %2088 = vmatpush2.msra.mxu0 0.0
        %2089 = vmatprep.subr.mxu0 0.0
        %2090 = vmatpush2.msra.mxu0 0.0
        %2091 = vmatprep.subr.mxu0 0.0
        %2092 = vmatpush2.msra.mxu0 0.0
        %2093 = vmatprep.mubr.f32.mxu0 0.0
        %2094 = vmatmul.mubr.f32.gmra.mxu0 %v1846
        %v2095 = vpop.f32.mrf.mxu0
        %v2096 = vadd.f32 %v2027, %v2095
        %v2097 = vpop.f32.mrf.mxu0
        %2098 = vmatprep.mubr.f32.mxu0 0.0
        %2099 = vmatmul.mubr.f32.gmra.mxu0 %v1847
        %v2100 = vpop.f32.mrf.mxu0
        %v2101 = vadd.f32 %v2027, %v2100
        %v2102 = vpop.f32.mrf.mxu0
        %2103 = vmatprep.mubr.f32.mxu0 0.0
        %2104 = vmatmul.mubr.f32.gmra.mxu0 %v1848
        %v2105 = vpop.f32.mrf.mxu0
        %v2106 = vadd.f32 %v2027, %v2105
        %v2107 = vpop.f32.mrf.mxu0
        %2108 = vmatprep.mubr.f32.mxu0 0.0
        %2109 = vmatmul.mubr.f32.gmra.mxu0 %v1849
        %v2110 = vpop.f32.mrf.mxu0
        %v2111 = vadd.f32 %v2027, %v2110
        %v2112 = vpop.f32.mrf.mxu0
        %2113 = vmatprep.mubr.f32.mxu0 0.0
        %2114 = vmatmul.mubr.f32.gmra.mxu0 %v1850
        %v2115 = vpop.f32.mrf.mxu0
        %v2116 = vadd.f32 %v2027, %v2115
        %v2117 = vpop.f32.mrf.mxu0
        %2118 = vmatprep.mubr.f32.mxu0 0.0
        %2119 = vmatmul.mubr.f32.gmra.mxu0 %v1851
        %v2120 = vpop.f32.mrf.mxu0
        %v2121 = vadd.f32 %v2027, %v2120
        %v2122 = vpop.f32.mrf.mxu0
        %2123 = vmatprep.mubr.f32.mxu0 0.0
        %2124 = vmatmul.mubr.f32.gmra.mxu0 %v1852
        %v2125 = vpop.f32.mrf.mxu0
        %v2126 = vadd.f32 %v2027, %v2125
        %v2127 = vpop.f32.mrf.mxu0
        %2128 = vmatprep.mubr.f32.mxu0 0.0
        %2129 = vmatmul.mubr.f32.gmra.mxu0 %v1853
        %v2130 = vpop.f32.mrf.mxu0
        %v2131 = vadd.f32 %v2027, %v2130
        %v2132 = vpop.f32.mrf.mxu0
        %2133 = vmatprep.mubr.f32.mxu0 0.0
        %2134 = vmatmul.mubr.f32.gmra.mxu0 %v1854
        %v2135 = vpop.f32.mrf.mxu0
        %v2136 = vadd.f32 %v2027, %v2135
        %v2137 = vpop.f32.mrf.mxu0
        %2138 = vmatprep.mubr.f32.mxu0 0.0
        %2139 = vmatmul.mubr.f32.gmra.mxu0 %v1855
        %v2140 = vpop.f32.mrf.mxu0
        %v2141 = vadd.f32 %v2027, %v2140
        %v2142 = vpop.f32.mrf.mxu0
        %2143 = vmatprep.mubr.f32.mxu0 0.0
        %2144 = vmatmul.mubr.f32.gmra.mxu0 %v1856
        %v2145 = vpop.f32.mrf.mxu0
        %v2146 = vadd.f32 %v2027, %v2145
        %v2147 = vpop.f32.mrf.mxu0
        %2148 = vmatprep.mubr.f32.mxu0 0.0
        %2149 = vmatmul.mubr.f32.gmra.mxu0 %v1857
        %v2150 = vpop.f32.mrf.mxu0
        %v2151 = vadd.f32 %v2027, %v2150
        %v2152 = vpop.f32.mrf.mxu0
        %2153 = vmatprep.mubr.f32.mxu0 0.0
        %2154 = vmatmul.mubr.f32.gmra.mxu0 %v1858
        %v2155 = vpop.f32.mrf.mxu0
        %v2156 = vadd.f32 %v2027, %v2155
        %v2157 = vpop.f32.mrf.mxu0
        %2158 = vmatprep.mubr.f32.mxu0 0.0
        %2159 = vmatmul.mubr.f32.gmra.mxu0 %v1859
        %v2160 = vpop.f32.mrf.mxu0
        %v2161 = vadd.f32 %v2027, %v2160
        %v2162 = vpop.f32.mrf.mxu0
        %2163 = vmatprep.mubr.f32.mxu0 0.0
        %2164 = vmatmul.mubr.f32.gmra.mxu0 %v1860
        %v2165 = vpop.f32.mrf.mxu0
        %v2166 = vadd.f32 %v2027, %v2165
        %v2167 = vpop.f32.mrf.mxu0
        %2168 = vmatprep.mubr.f32.mxu0 0.0
        %2169 = vmatmul.mubr.f32.gmra.mxu0 %v1861
        %v2170 = vpop.f32.mrf.mxu0
        %v2171 = vadd.f32 %v2027, %v2170
        %v2172 = vpop.f32.mrf.mxu0
        %2173 = vdwg.mxu0
        %2174 = vst.msk [vmem:[%s187] sm:$0xff] %vm232, %v2096
        %2175 = vst.msk [vmem:[%s187 + $0x8] sm:$0xff] %vm232, %v2101
        %2176 = vst.msk [vmem:[%s187 + $0x10] sm:$0xff] %vm232, %v2106
        %2177 = vst.msk [vmem:[%s187 + $0x18] sm:$0xff] %vm232, %v2111
        %2178 = vst.msk [vmem:[%s187 + $0x20] sm:$0xff] %vm232, %v2116
        %2179 = vst.msk [vmem:[%s187 + $0x28] sm:$0xff] %vm232, %v2121
        %2180 = vst.msk [vmem:[%s187 + $0x30] sm:$0xff] %vm232, %v2126
        %2181 = vst.msk [vmem:[%s187 + $0x38] sm:$0xff] %vm232, %v2131
        %2182 = vst.msk [vmem:[%s187 + $0x40] sm:$0xff] %vm232, %v2136
        %2183 = vst.msk [vmem:[%s187 + $0x48] sm:$0xff] %vm232, %v2141
        %2184 = vst.msk [vmem:[%s187 + $0x50] sm:$0xff] %vm232, %v2146
        %2185 = vst.msk [vmem:[%s187 + $0x58] sm:$0xff] %vm232, %v2151
        %2186 = vst.msk [vmem:[%s187 + $0x60] sm:$0xff] %vm232, %v2156
        %2187 = vst.msk [vmem:[%s187 + $0x68] sm:$0xff] %vm232, %v2161
        %2188 = vst.msk [vmem:[%s187 + $0x70] sm:$0xff] %vm232, %v2166
        %2189 = vst.msk [vmem:[%s187 + $0x78] sm:$0xff] %vm232, %v2171
        %2190 = vmatprep.subr.mxu0 0.0
        %2191 = vmatpush1.msra.mxu0 %v207
        %2192 = vmatprep.subr.mxu0 0.0
        %2193 = vmatpush1.msra.mxu0 %v206
        %2194 = vmatprep.subr.mxu0 0.0
        %2195 = vmatpush1.msra.mxu0 %v205
        %2196 = vmatprep.subr.mxu0 0.0
        %2197 = vmatpush1.msra.mxu0 %v204
        %2198 = vmatprep.subr.mxu0 0.0
        %2199 = vmatpush1.msra.mxu0 %v203
        %2200 = vmatprep.subr.mxu0 0.0
        %2201 = vmatpush1.msra.mxu0 %v202
        %2202 = vmatprep.subr.mxu0 0.0
        %2203 = vmatpush1.msra.mxu0 %v201
        %2204 = vmatprep.subr.mxu0 0.0
        %2205 = vmatpush1.msra.mxu0 %v200
        %2206 = vmatprep.subr.mxu0 0.0
        %2207 = vmatpush1.msra.mxu0 %v199
        %2208 = vmatprep.subr.mxu0 0.0
        %2209 = vmatpush1.msra.mxu0 %v198
        %2210 = vmatprep.subr.mxu0 0.0
        %2211 = vmatpush1.msra.mxu0 %v197
        %2212 = vmatprep.subr.mxu0 0.0
        %2213 = vmatpush1.msra.mxu0 %v196
        %2214 = vmatprep.subr.mxu0 0.0
        %2215 = vmatpush1.msra.mxu0 %v195
        %2216 = vmatprep.subr.mxu0 0.0
        %2217 = vmatpush1.msra.mxu0 %v194
        %2218 = vmatprep.subr.mxu0 0.0
        %2219 = vmatpush1.msra.mxu0 %v193
        %2220 = vmatprep.subr.mxu0 0.0
        %2221 = vmatpush1.msra.mxu0 %v192
        %2222 = vmatprep.subr.mxu0 0.0
        %2223 = vmatpush2.msra.mxu0 0.0
        %2224 = vmatprep.subr.mxu0 0.0
        %2225 = vmatpush2.msra.mxu0 0.0
        %2226 = vmatprep.subr.mxu0 0.0
        %2227 = vmatpush2.msra.mxu0 0.0
        %2228 = vmatprep.subr.mxu0 0.0
        %2229 = vmatpush2.msra.mxu0 0.0
        %2230 = vmatprep.subr.mxu0 0.0
        %2231 = vmatpush2.msra.mxu0 0.0
        %2232 = vmatprep.subr.mxu0 0.0
        %2233 = vmatpush2.msra.mxu0 0.0
        %2234 = vmatprep.subr.mxu0 0.0
        %2235 = vmatpush2.msra.mxu0 0.0
        %2236 = vmatprep.subr.mxu0 0.0
        %2237 = vmatpush2.msra.mxu0 0.0
        %2238 = vmatprep.subr.mxu0 0.0
        %2239 = vmatpush2.msra.mxu0 0.0
        %2240 = vmatprep.subr.mxu0 0.0
        %2241 = vmatpush2.msra.mxu0 0.0
        %2242 = vmatprep.subr.mxu0 0.0
        %2243 = vmatpush2.msra.mxu0 0.0
        %2244 = vmatprep.subr.mxu0 0.0
        %2245 = vmatpush2.msra.mxu0 0.0
        %2246 = vmatprep.subr.mxu0 0.0
        %2247 = vmatpush2.msra.mxu0 0.0
        %2248 = vmatprep.subr.mxu0 0.0
        %2249 = vmatpush2.msra.mxu0 0.0
        %2250 = vmatprep.subr.mxu0 0.0
        %2251 = vmatpush2.msra.mxu0 0.0
        %2252 = vmatprep.subr.mxu0 0.0
        %2253 = vmatpush2.msra.mxu0 0.0
        %2254 = vmatprep.mubr.f32.mxu0 0.0
        %2255 = vmatmul.mubr.f32.gmra.mxu0 %v2007
        %v2256 = vpop.f32.mrf.mxu0
        %v2257 = vadd.f32 %v2027, %v2256
        %v2258 = vpop.f32.mrf.mxu0
        %2259 = vmatprep.mubr.f32.mxu0 0.0
        %2260 = vmatmul.mubr.f32.gmra.mxu0 %v2008
        %v2261 = vpop.f32.mrf.mxu0
        %v2262 = vadd.f32 %v2027, %v2261
        %v2263 = vpop.f32.mrf.mxu0
        %2264 = vmatprep.mubr.f32.mxu0 0.0
        %2265 = vmatmul.mubr.f32.gmra.mxu0 %v2009
        %v2266 = vpop.f32.mrf.mxu0
        %v2267 = vadd.f32 %v2027, %v2266
        %v2268 = vpop.f32.mrf.mxu0
        %2269 = vmatprep.mubr.f32.mxu0 0.0
        %2270 = vmatmul.mubr.f32.gmra.mxu0 %v2010
        %v2271 = vpop.f32.mrf.mxu0
        %v2272 = vadd.f32 %v2027, %v2271
        %v2273 = vpop.f32.mrf.mxu0
        %2274 = vmatprep.mubr.f32.mxu0 0.0
        %2275 = vmatmul.mubr.f32.gmra.mxu0 %v2011
        %v2276 = vpop.f32.mrf.mxu0
        %v2277 = vadd.f32 %v2027, %v2276
        %v2278 = vpop.f32.mrf.mxu0
        %2279 = vmatprep.mubr.f32.mxu0 0.0
        %2280 = vmatmul.mubr.f32.gmra.mxu0 %v2012
        %v2281 = vpop.f32.mrf.mxu0
        %v2282 = vadd.f32 %v2027, %v2281
        %v2283 = vpop.f32.mrf.mxu0
        %2284 = vmatprep.mubr.f32.mxu0 0.0
        %2285 = vmatmul.mubr.f32.gmra.mxu0 %v2013
        %v2286 = vpop.f32.mrf.mxu0
        %v2287 = vadd.f32 %v2027, %v2286
        %v2288 = vpop.f32.mrf.mxu0
        %2289 = vmatprep.mubr.f32.mxu0 0.0
        %2290 = vmatmul.mubr.f32.gmra.mxu0 %v2014
        %v2291 = vpop.f32.mrf.mxu0
        %v2292 = vadd.f32 %v2027, %v2291
        %v2293 = vpop.f32.mrf.mxu0
        %2294 = vmatprep.mubr.f32.mxu0 0.0
        %2295 = vmatmul.mubr.f32.gmra.mxu0 %v2015
        %v2296 = vpop.f32.mrf.mxu0
        %v2297 = vadd.f32 %v2027, %v2296
        %v2298 = vpop.f32.mrf.mxu0
        %2299 = vmatprep.mubr.f32.mxu0 0.0
        %2300 = vmatmul.mubr.f32.gmra.mxu0 %v2016
        %v2301 = vpop.f32.mrf.mxu0
        %v2302 = vadd.f32 %v2027, %v2301
        %v2303 = vpop.f32.mrf.mxu0
        %2304 = vmatprep.mubr.f32.mxu0 0.0
        %2305 = vmatmul.mubr.f32.gmra.mxu0 %v2017
        %v2306 = vpop.f32.mrf.mxu0
        %v2307 = vadd.f32 %v2027, %v2306
        %v2308 = vpop.f32.mrf.mxu0
        %2309 = vmatprep.mubr.f32.mxu0 0.0
        %2310 = vmatmul.mubr.f32.gmra.mxu0 %v2018
        %v2311 = vpop.f32.mrf.mxu0
        %v2312 = vadd.f32 %v2027, %v2311
        %v2313 = vpop.f32.mrf.mxu0
        %2314 = vmatprep.mubr.f32.mxu0 0.0
        %2315 = vmatmul.mubr.f32.gmra.mxu0 %v2019
        %v2316 = vpop.f32.mrf.mxu0
        %v2317 = vadd.f32 %v2027, %v2316
        %v2318 = vpop.f32.mrf.mxu0
        %2319 = vmatprep.mubr.f32.mxu0 0.0
        %2320 = vmatmul.mubr.f32.gmra.mxu0 %v2020
        %v2321 = vpop.f32.mrf.mxu0
        %v2322 = vadd.f32 %v2027, %v2321
        %v2323 = vpop.f32.mrf.mxu0
        %2324 = vmatprep.mubr.f32.mxu0 0.0
        %2325 = vmatmul.mubr.f32.gmra.mxu0 %v2021
        %v2326 = vpop.f32.mrf.mxu0
        %v2327 = vadd.f32 %v2027, %v2326
        %v2328 = vpop.f32.mrf.mxu0
        %2329 = vmatprep.mubr.f32.mxu0 0.0
        %2330 = vmatmul.mubr.f32.gmra.mxu0 %v2022
        %v2331 = vpop.f32.mrf.mxu0
        %v2332 = vadd.f32 %v2027, %v2331
        %v2333 = vpop.f32.mrf.mxu0
        %2334 = vdwg.mxu0
        %2335 = vst.msk [vmem:[%s187 + $0x80] sm:$0xff] %vm232, %v2257
        %2336 = vst.msk [vmem:[%s187 + $0x88] sm:$0xff] %vm232, %v2262
        %2337 = vst.msk [vmem:[%s187 + $0x90] sm:$0xff] %vm232, %v2267
        %2338 = vst.msk [vmem:[%s187 + $0x98] sm:$0xff] %vm232, %v2272
        %2339 = vst.msk [vmem:[%s187 + $0xa0] sm:$0xff] %vm232, %v2277
        %2340 = vst.msk [vmem:[%s187 + $0xa8] sm:$0xff] %vm232, %v2282
        %2341 = vst.msk [vmem:[%s187 + $0xb0] sm:$0xff] %vm232, %v2287
        %2342 = vst.msk [vmem:[%s187 + $0xb8] sm:$0xff] %vm232, %v2292
        %2343 = vst.msk [vmem:[%s187 + $0xc0] sm:$0xff] %vm232, %v2297
        %2344 = vst.msk [vmem:[%s187 + $0xc8] sm:$0xff] %vm232, %v2302
        %2345 = vst.msk [vmem:[%s187 + $0xd0] sm:$0xff] %vm232, %v2307
        %2346 = vst.msk [vmem:[%s187 + $0xd8] sm:$0xff] %vm232, %v2312
        %2347 = vst.msk [vmem:[%s187 + $0xe0] sm:$0xff] %vm232, %v2317
        %2348 = vst.msk [vmem:[%s187 + $0xe8] sm:$0xff] %vm232, %v2322
        %2349 = vst.msk [vmem:[%s187 + $0xf0] sm:$0xff] %vm232, %v2327
        %2350 = vst.msk [vmem:[%s187 + $0xf8] sm:$0xff] %vm232, %v2332
        %s2351 = smul.u32 32, %s15
        %p2352 = scmp.lt.s32.totalorder %s2351, 63
        %s2353 = scalar_select %p2352, %s2351, 63
        %s2354 = smul.addr %s2353, 8
        %s2355 = scalar_lea.vmem %s3, %s2354
        // Predicated region
        $region37: #{tpu_custom_call.1} parent=31 // pred_check
          %p2356 = pneg %p101
        $region38: #{tpu_custom_call.1} parent=31 // pred_check_branch
          %2358 = sbr.rel (%p2356) target = $region40
        $region39: #{tpu_custom_call.1} parent=31 // pred_region
          %s2359 = smul.u32 32, %s15
        $region40: #{tpu_custom_call.1} parent=31 // pred_fallthru
          _
      $region32: #{tpu_custom_call.1} parent=5 // pred_fallthru
        _
      %p2360 = scmp.le.s32.totalorder 2, %s10
      // Predicated region
      $region41: #{tpu_custom_call.1} parent=5 // pred_check
        %p2361 = pneg %p2360
      $region42: #{tpu_custom_call.1} parent=5 // pred_check_branch
        %2363 = sbr.rel (%p2361) target = $region44
      $region43: #{tpu_custom_call.1} parent=5 // pred_region
        %s2364 = ssub.s32 %s10, 2
        // Predicated region
        $region45: #{tpu_custom_call.1} parent=43 // pred_check
          %p2365 = pneg %p107
        $region46: #{tpu_custom_call.1} parent=43 // pred_check_branch
          %2367 = sbr.rel (%p2365) target = $region48
        $region47: #{tpu_custom_call.1} parent=43 // pred_region
          %s2368 = smul.u32 32, %s16
          %p2369 = scmp.lt.s32.totalorder %s2368, 63
          %s2370 = scalar_select %p2369, %s2368, 63
          %s2371 = smul.addr %s2370, 8
          %s2372 = scalar_lea.vmem %s3, %s2371
        $region48: #{tpu_custom_call.1} parent=43 // pred_fallthru
          _
      $region44: #{tpu_custom_call.1} parent=5 // pred_fallthru
        _
    $region6: #{tpu_custom_call.1} parent=1 // loop_footer
      %s14 = sadd.s32 1, %s10
    $region7: #{tpu_custom_call.1} parent=1 // loop_footer_branch
      %9 = sbr.rel target = $region3
    $region8: #{tpu_custom_call.1} parent=1 // loop_exit
      _
    %2373 = vsyncpa [#allocation3], 1
    %s2374 = scalar_lea.sflag [#allocation3], 1
    %2375 = vsyncpa %s2374, 1

</llo_original>
